<compile_context>
chip_gen: v7x
topology: tpu7x:2x2x1
jax: 0.10.0
libtpu: 0.0.40
codegen_flags: <defaults>
</compile_context>

<pallas_src>
import functools

import jax
import jax.numpy as jnp
from jax.experimental import pallas as pl
from jax.experimental.pallas import tpu as pltpu


def _round_up(x, m):
    return ((x + m - 1) // m) * m


def _pick_tile_k(f, max_tile, quantum=128):
    """Largest lane-aligned K tile; prefer an exact divisor of f (no fc1-weight
    row padding) unless that would blow up the grid step count."""
    pad_steps = -(-f // max_tile)
    if f % quantum == 0:
        best = quantum
        for t in range(quantum, min(max_tile, f) + 1, quantum):
            if f % t == 0:
                best = t
        if f // best <= 2 * pad_steps:
            return best
    return min(max_tile, _round_up(f, quantum))


# ----------------------------- Pallas kernels ------------------------------

def conv_pool_relu_kernel(p_ref, w_ref, b_ref, o_ref):
    """Fused conv-as-matmul + bias + 2x2 maxpool + ReLU epilogue.

    p_ref: (4, TM, K) bf16  im2col patches for the 4 taps of each 2x2 pooling
                            window; rows = pooled output pixels (b, hp, wp)
    w_ref: (K, CP)    bf16  conv weight, Cout zero-padded to CP (128-multiple)
    b_ref: (1, CP)    f32
    o_ref: (TM, CP)   bf16  pooled + ReLU'd activations (lane-dense)
    """
    # NOTE: the 4 tap dots could be fused into one (4*TM,K)@(K,CP) push, but
    # the leading-dim collapse risks an in-VMEM relayout and the layer is
    # HBM-bound after the bf16 change, so keep 4 clean MXU pushes.
    w = w_ref[...]
    t0 = jnp.dot(p_ref[0], w, preferred_element_type=jnp.float32)
    t1 = jnp.dot(p_ref[1], w, preferred_element_type=jnp.float32)
    t2 = jnp.dot(p_ref[2], w, preferred_element_type=jnp.float32)
    t3 = jnp.dot(p_ref[3], w, preferred_element_type=jnp.float32)
    m = jnp.maximum(jnp.maximum(t0, t1), jnp.maximum(t2, t3))
    # bias is shared by all 4 taps and ReLU is monotone, so the epilogue is exact.
    o_ref[...] = jnp.maximum(m + b_ref[...], 0.0).astype(o_ref.dtype)


def head_kernel(f_ref, w1_ref, b1_ref, w2_ref, b2_ref, w3_ref, b3_ref,
                o_ref, acc_ref, *, transform):
    """fc1 (K-tiled over grid axis 0, f32 accumulator) -> relu -> fc2 -> relu
    -> fc3 -> optional sigmoid*4.  Input is the pre-computed batch mean."""
    k = pl.program_id(0)

    @pl.when(k == 0)
    def _():
        acc_ref[...] = jnp.zeros_like(acc_ref)

    acc_ref[...] += jnp.dot(f_ref[...], w1_ref[...],
                            preferred_element_type=jnp.float32)      # (1, N1)

    @pl.when(k == pl.num_programs(0) - 1)
    def _():
        h = jnp.maximum(acc_ref[...] + b1_ref[...], 0.0)             # fc1 + relu
        h = jnp.maximum(
            jnp.dot(h, w2_ref[...], preferred_element_type=jnp.float32)
            + b2_ref[...], 0.0)                                      # fc2 + relu
        o = (jnp.dot(h, w3_ref[...], preferred_element_type=jnp.float32)
             + b3_ref[...])                                          # fc3
        if transform:
            o = jax.nn.sigmoid(o) * 4.0
        o_ref[...] = o


# ------------------------------ wrappers ------------------------------------

def conv_pool_relu(x, w, b, *, cin, tm_max=1024, compute_dtype=jnp.bfloat16):
    """Fused Conv2d(k=3) -> MaxPool2d(2) -> ReLU.

    x: (B, H, W, C>=cin) any float dtype (only the first `cin` channels are
       used — the channel slice is fused into the tap gather, so padded
       activations from the previous layer never take a separate HBM pass).
    w: (3, 3, cin, Cout);  b: (Cout,)
    Returns (B, Hp, Wp, CP) compute_dtype with channels >= Cout zero-filled.
    """
    B, H, W, _ = x.shape
    KH, KW, _, Cout = w.shape
    Ho, Wo = H - KH + 1, W - KW + 1
    Hp, Wp = Ho // 2, Wo // 2
    K = KH * KW * cin
    CP = _round_up(Cout, 128)

    # Pool-tap im2col straight from the layer input (XLA gather/concat only,
    # no conv-resolution intermediate in HBM).  Tap (di,dj) of pooled pixel
    # (p,q) reads input rows 2p+di+ki and cols 2q+dj+kj.  Patches are bf16.
    taps = []
    for di in range(2):
        for dj in range(2):
            cols = []
            for ki in range(KH):
                for kj in range(KW):
                    r0, c0 = di + ki, dj + kj
                    cols.append(x[:, r0:r0 + 2 * Hp:2, c0:c0 + 2 * Wp:2, :cin])
            taps.append(jnp.concatenate(cols, axis=-1).reshape(B * Hp * Wp, K))
    p = jnp.stack(taps, axis=0).astype(compute_dtype)                # (4, M, K)

    M = B * Hp * Wp
    tile_m = min(tm_max, _round_up(M, 16))     # 16-aligned for bf16 sublanes
    Mp = _round_up(M, tile_m)
    if Mp != M:
        p = jnp.pad(p, ((0, 0), (0, Mp - M), (0, 0)))

    w2d = jnp.pad(w.reshape(K, Cout).astype(compute_dtype),
                  ((0, 0), (0, CP - Cout)))
    b2d = jnp.pad(b.astype(jnp.float32), (0, CP - Cout)).reshape(1, CP)

    itemsize = jnp.dtype(compute_dtype).itemsize
    cost = pl.CostEstimate(
        flops=2 * 4 * Mp * K * CP,
        transcendentals=0,
        bytes_accessed=(p.size * itemsize + w2d.size * itemsize
                        + b2d.size * 4 + Mp * CP * itemsize))

    out = pl.pallas_call(
        conv_pool_relu_kernel,
        out_shape=jax.ShapeDtypeStruct((Mp, CP), compute_dtype),
        grid=(Mp // tile_m,),
        in_specs=[
            pl.BlockSpec((4, tile_m, K), lambda m: (0, m, 0)),
            pl.BlockSpec((K, CP), lambda m: (0, 0)),
            pl.BlockSpec((1, CP), lambda m: (0, 0)),
        ],
        out_specs=pl.BlockSpec((tile_m, CP), lambda m: (m, 0)),
        compiler_params=pltpu.CompilerParams(
            dimension_semantics=("parallel",),
            vmem_limit_bytes=32 * 1024 * 1024),   # v5e default is only 16 MiB
        cost_estimate=cost,
    )(p, w2d, b2d)
    return out[:M].reshape(B, Hp, Wp, CP)


def pallas_head(fmean, w1, b1, w2, b2, w3, b3, *, transform=True,
                tk_max=8192, compute_dtype=jnp.bfloat16):
    """fmean: (1, F) batch-mean of NHWC-flattened features.
    Streams w1 over a K grid axis in bf16 with an f32 accumulator."""
    F = fmean.shape[1]
    N1 = _round_up(w1.shape[1], 128)           # fc1 width padded to full lanes
    N2 = w2.shape[1]
    out_size = w3.shape[1]

    tile_k = _pick_tile_k(F, tk_max)
    Fp = _round_up(F, tile_k)

    f_p = jnp.pad(fmean.astype(compute_dtype), ((0, 0), (0, Fp - F)))
    w1p = jnp.pad(w1.astype(compute_dtype),
                  ((0, Fp - F), (0, N1 - w1.shape[1])))   # no-op if prepared
    b1p = jnp.pad(b1.astype(jnp.float32), (0, N1 - b1.shape[0])).reshape(1, N1)
    w2p = jnp.pad(w2.astype(jnp.float32), ((0, N1 - w2.shape[0]), (0, 0)))
    b2p = b2.astype(jnp.float32).reshape(1, N2)
    w3f = w3.astype(jnp.float32)
    b3p = b3.astype(jnp.float32).reshape(1, out_size)

    itemsize = jnp.dtype(compute_dtype).itemsize
    cost = pl.CostEstimate(
        flops=2 * Fp * N1 + 2 * N1 * N2 + 2 * N2 * out_size,
        transcendentals=out_size if transform else 0,
        bytes_accessed=(f_p.size * itemsize + w1p.size * itemsize
                        + (w2p.size + w3f.size + N1 + N2 + 2 * out_size) * 4))

    out = pl.pallas_call(
        functools.partial(head_kernel, transform=transform),
        out_shape=jax.ShapeDtypeStruct((1, out_size), jnp.float32),
        grid=(Fp // tile_k,),
        in_specs=[
            pl.BlockSpec((1, tile_k), lambda k: (0, k)),
            pl.BlockSpec((tile_k, N1), lambda k: (k, 0)),
            pl.BlockSpec((1, N1), lambda k: (0, 0)),
            pl.BlockSpec((N1, N2), lambda k: (0, 0)),
            pl.BlockSpec((1, N2), lambda k: (0, 0)),
            pl.BlockSpec((w3.shape[0], out_size), lambda k: (0, 0)),
            pl.BlockSpec((1, out_size), lambda k: (0, 0)),
        ],
        out_specs=pl.BlockSpec((1, out_size), lambda k: (0, 0)),
        scratch_shapes=[pltpu.VMEM((1, N1), jnp.float32)],
        compiler_params=pltpu.CompilerParams(
            dimension_semantics=("arbitrary",),    # single accumulator: must NOT be parallel
            vmem_limit_bytes=32 * 1024 * 1024),
        cost_estimate=cost,
    )(f_p, w1p, b1p, w2p, b2p, w3f, b3p)
    return out.reshape(out_size)


# ------------------------------ model ---------------------------------------

def init_params(img_size=16, out_size=5):
    conv_hw = int(img_size / 4 - 2)            # matches the PyTorch __init__
    fc1_in = 64 * conv_hw * conv_hw
    keys = jax.random.split(jax.random.PRNGKey(42), 10)
    s = 0.05

    # fc1 weight: generated in PyTorch NCHW-flatten row order (c, hp, wp),
    # then permuted ONCE here to the NHWC-flatten order (hp, wp, c) that the
    # conv kernels emit, zero-padded 100->128 on the output dim (lane-dense)
    # and cast to bf16 — the forward pass streams it with no per-call
    # transpose / pad / cast traffic.  (Permute the same way when importing a
    # real PyTorch state dict.)
    w_fc1 = s * jax.random.normal(keys[4], (fc1_in, 100), jnp.float32)
    w_fc1 = (w_fc1.reshape(64, conv_hw, conv_hw, 100)
                  .transpose(1, 2, 0, 3).reshape(fc1_in, 100))
    w_fc1 = jnp.pad(w_fc1, ((0, 0), (0, 28))).astype(jnp.bfloat16)

    return {
        # conv weights stored (KH, KW, Cin, Cout), bf16 for MXU streaming
        "w_conv1": (s * jax.random.normal(keys[0], (3, 3, 1, 32))).astype(jnp.bfloat16),
        "b_conv1": s * jax.random.normal(keys[1], (32,), jnp.float32),
        "w_conv2": (s * jax.random.normal(keys[2], (3, 3, 32, 64))).astype(jnp.bfloat16),
        "b_conv2": s * jax.random.normal(keys[3], (64,), jnp.float32),
        "w_fc1": w_fc1,                                   # (fc1_in, 128) bf16
        "b_fc1": s * jax.random.normal(keys[5], (100,), jnp.float32),
        "w_fc2": s * jax.random.normal(keys[6], (100, 20), jnp.float32),
        "b_fc2": s * jax.random.normal(keys[7], (20,), jnp.float32),
        "w_fc3": s * jax.random.normal(keys[8], (20, out_size), jnp.float32),
        "b_fc3": s * jax.random.normal(keys[9], (out_size,), jnp.float32),
    }


def shapenet_forward(x_nchw, params, transform=True):
    """x_nchw: (B, 1, H, W) float32 -> (out_size,) float32."""
    # NCHW -> NHWC is a free reshape for Cin=1 (size-1 axis move).
    x = jnp.transpose(x_nchw, (0, 2, 3, 1))

    # conv layer 1: Conv2d(1,32,3) -> MaxPool2d(2) -> ReLU   (one fused kernel)
    a1 = conv_pool_relu(x, params["w_conv1"], params["b_conv1"],
                        cin=1, tm_max=4096)
    # conv layer 2: Conv2d(32,64,3) -> MaxPool2d(2) -> ReLU  (one fused kernel)
    # channel slice of the padded a1 is fused into the tap gather via cin=32.
    a2 = conv_pool_relu(a1, params["w_conv2"], params["b_conv2"],
                        cin=32, tm_max=1024)

    # Batch mean computed once here (tiny XLA reduce) so the streamed head
    # consumes a single (1, F) row; NHWC flatten order matches w_fc1 rows.
    fmean = jnp.mean(a2[..., :64].astype(jnp.float32), axis=0).reshape(1, -1)

    return pallas_head(
        fmean,
        params["w_fc1"], params["b_fc1"],
        params["w_fc2"], params["b_fc2"],
        params["w_fc3"], params["b_fc3"],
        transform=transform,
    )


if __name__ == "__main__":
    img_size = 16       # small stand-in for the default 256; same formula
    out_size = 5
    batch = 2

    key = jax.random.PRNGKey(0)
    x = jax.random.normal(key, (batch, 1, img_size, img_size), jnp.float32)

    params = init_params(img_size=img_size, out_size=out_size)

    fwd = jax.jit(functools.partial(shapenet_forward, transform=True))
    out = jax.block_until_ready(fwd(x, params))

    assert out.shape == (out_size,)
    assert bool(jnp.all(jnp.isfinite(out)))
    assert bool(jnp.all(out >= 0.0)) and bool(jnp.all(out <= 4.0))
    print("KERNEL_OK")
</pallas_src>

<mosaic_0001>
module attributes {stable_mosaic.version = 11 : i64} {
  func.func @conv_pool_relu_kernel(%arg0: i32, %arg1: memref<4x112x9xbf16, #tpu.memory_space<vmem>>, %arg2: memref<9x128xbf16, #tpu.memory_space<vmem>>, %arg3: memref<1x128xf32, #tpu.memory_space<vmem>>, %arg4: memref<112x128xbf16, #tpu.memory_space<vmem>>) attributes {dimension_semantics = [#tpu.dimension_semantics<parallel>], iteration_bounds = array<i64: 1>, scalar_prefetch = 0 : i64, scratch_operands = 0 : i64, tpu.core_type = #tpu.core_type<tc>, window_params = [{transform_indices = @transform_0, window_bounds = array<i64: 4, 112, 9>}, {pipeline_mode = #tpu.pipeline_mode<synchronous>, transform_indices = @transform_1, window_bounds = array<i64: 9, 128>}, {pipeline_mode = #tpu.pipeline_mode<synchronous>, transform_indices = @transform_2, window_bounds = array<i64: 1, 128>}, {transform_indices = @transform_3, window_bounds = array<i64: 112, 128>}]} {
    %c0 = arith.constant 0 : index
    %c0_0 = arith.constant 0 : index
    %0 = vector.load %arg2[%c0, %c0_0] : memref<9x128xbf16, #tpu.memory_space<vmem>>, vector<9x128xbf16>
    %c0_1 = arith.constant 0 : index
    %c0_2 = arith.constant 0 : index
    %c0_3 = arith.constant 0 : index
    %1 = vector.load %arg1[%c0_1, %c0_2, %c0_3] : memref<4x112x9xbf16, #tpu.memory_space<vmem>>, vector<1x112x9xbf16>
    %2 = vector.shape_cast %1 : vector<1x112x9xbf16> to vector<112x9xbf16>
    %cst = arith.constant dense<0.000000e+00> : vector<112x128xf32>
    %3 = tpu.matmul %2, %0, %cst {dimension_numbers = #tpu.dot_dimension_numbers<[1], [0], [0], [1], [0, 0, 1, 1], [], []>} : vector<112x9xbf16>, vector<9x128xbf16>, vector<112x128xf32> -> vector<112x128xf32>
    %c1 = arith.constant 1 : index
    %c0_4 = arith.constant 0 : index
    %c0_5 = arith.constant 0 : index
    %4 = vector.load %arg1[%c1, %c0_4, %c0_5] : memref<4x112x9xbf16, #tpu.memory_space<vmem>>, vector<1x112x9xbf16>
    %5 = vector.shape_cast %4 : vector<1x112x9xbf16> to vector<112x9xbf16>
    %cst_6 = arith.constant dense<0.000000e+00> : vector<112x128xf32>
    %6 = tpu.matmul %5, %0, %cst_6 {dimension_numbers = #tpu.dot_dimension_numbers<[1], [0], [0], [1], [0, 0, 1, 1], [], []>} : vector<112x9xbf16>, vector<9x128xbf16>, vector<112x128xf32> -> vector<112x128xf32>
    %c2 = arith.constant 2 : index
    %c0_7 = arith.constant 0 : index
    %c0_8 = arith.constant 0 : index
    %7 = vector.load %arg1[%c2, %c0_7, %c0_8] : memref<4x112x9xbf16, #tpu.memory_space<vmem>>, vector<1x112x9xbf16>
    %8 = vector.shape_cast %7 : vector<1x112x9xbf16> to vector<112x9xbf16>
    %cst_9 = arith.constant dense<0.000000e+00> : vector<112x128xf32>
    %9 = tpu.matmul %8, %0, %cst_9 {dimension_numbers = #tpu.dot_dimension_numbers<[1], [0], [0], [1], [0, 0, 1, 1], [], []>} : vector<112x9xbf16>, vector<9x128xbf16>, vector<112x128xf32> -> vector<112x128xf32>
    %c3 = arith.constant 3 : index
    %c0_10 = arith.constant 0 : index
    %c0_11 = arith.constant 0 : index
    %10 = vector.load %arg1[%c3, %c0_10, %c0_11] : memref<4x112x9xbf16, #tpu.memory_space<vmem>>, vector<1x112x9xbf16>
    %11 = vector.shape_cast %10 : vector<1x112x9xbf16> to vector<112x9xbf16>
    %cst_12 = arith.constant dense<0.000000e+00> : vector<112x128xf32>
    %12 = tpu.matmul %11, %0, %cst_12 {dimension_numbers = #tpu.dot_dimension_numbers<[1], [0], [0], [1], [0, 0, 1, 1], [], []>} : vector<112x9xbf16>, vector<9x128xbf16>, vector<112x128xf32> -> vector<112x128xf32>
    %13 = arith.maximumf %3, %6 : vector<112x128xf32>
    %14 = arith.maximumf %9, %12 : vector<112x128xf32>
    %15 = arith.maximumf %13, %14 : vector<112x128xf32>
    %c0_13 = arith.constant 0 : index
    %c0_14 = arith.constant 0 : index
    %16 = vector.load %arg3[%c0_13, %c0_14] : memref<1x128xf32, #tpu.memory_space<vmem>>, vector<1x128xf32>
    %17 = vector.broadcast %16 : vector<1x128xf32> to vector<112x128xf32>
    %18 = arith.addf %15, %17 : vector<112x128xf32>
    %cst_15 = arith.constant 0.000000e+00 : f32
    %19 = vector.broadcast %cst_15 : f32 to vector<112x128xf32>
    %20 = arith.maximumf %18, %19 : vector<112x128xf32>
    %21 = arith.truncf %20 : vector<112x128xf32> to vector<112x128xbf16>
    %c0_16 = arith.constant 0 : index
    %c0_17 = arith.constant 0 : index
    %22 = vector.load %arg4[%c0_16, %c0_17] : memref<112x128xbf16, #tpu.memory_space<vmem>>, vector<112x128xbf16>
    tpu.vector_store %arg4[%c0_16, %c0_17], %21 {strides = array<i32>} : memref<112x128xbf16, #tpu.memory_space<vmem>>, vector<112x128xbf16>,
    return
  }
  func.func @transform_0(%arg0: i32) -> (i32, i32, i32) {
    %c0_i32 = arith.constant 0 : i32
    %c0_i32_0 = arith.constant 0 : i32
    %c0_i32_1 = arith.constant 0 : i32
    return %c0_i32, %arg0, %c0_i32_0 : i32, i32, i32
  }
  func.func @transform_1(%arg0: i32) -> (i32, i32) {
    %c0_i32 = arith.constant 0 : i32
    %c0_i32_0 = arith.constant 0 : i32
    %c0_i32_1 = arith.constant 0 : i32
    return %c0_i32, %c0_i32_0 : i32, i32
  }
  func.func @transform_2(%arg0: i32) -> (i32, i32) {
    %c0_i32 = arith.constant 0 : i32
    %c0_i32_0 = arith.constant 0 : i32
    %c0_i32_1 = arith.constant 0 : i32
    return %c0_i32, %c0_i32_0 : i32, i32
  }
  func.func @transform_3(%arg0: i32) -> (i32, i32) {
    %c0_i32 = arith.constant 0 : i32
    %c0_i32_0 = arith.constant 0 : i32
    return %arg0, %c0_i32 : i32, i32
  }
}

module attributes {stable_mosaic.version = 11 : i64} {
  func.func @conv_pool_relu_kernel(%arg0: i32, %arg1: memref<4x16x288xbf16, #tpu.memory_space<vmem>>, %arg2: memref<288x128xbf16, #tpu.memory_space<vmem>>, %arg3: memref<1x128xf32, #tpu.memory_space<vmem>>, %arg4: memref<16x128xbf16, #tpu.memory_space<vmem>>) attributes {dimension_semantics = [#tpu.dimension_semantics<parallel>], iteration_bounds = array<i64: 1>, scalar_prefetch = 0 : i64, scratch_operands = 0 : i64, tpu.core_type = #tpu.core_type<tc>, window_params = [{transform_indices = @transform_0, window_bounds = array<i64: 4, 16, 288>}, {pipeline_mode = #tpu.pipeline_mode<synchronous>, transform_indices = @transform_1, window_bounds = array<i64: 288, 128>}, {pipeline_mode = #tpu.pipeline_mode<synchronous>, transform_indices = @transform_2, window_bounds = array<i64: 1, 128>}, {transform_indices = @transform_3, window_bounds = array<i64: 16, 128>}]} {
    %c0 = arith.constant 0 : index
    %c0_0 = arith.constant 0 : index
    %0 = vector.load %arg2[%c0, %c0_0] : memref<288x128xbf16, #tpu.memory_space<vmem>>, vector<288x128xbf16>
    %c0_1 = arith.constant 0 : index
    %c0_2 = arith.constant 0 : index
    %c0_3 = arith.constant 0 : index
    %1 = vector.load %arg1[%c0_1, %c0_2, %c0_3] : memref<4x16x288xbf16, #tpu.memory_space<vmem>>, vector<1x16x288xbf16>
    %2 = vector.shape_cast %1 : vector<1x16x288xbf16> to vector<16x288xbf16>
    %cst = arith.constant dense<0.000000e+00> : vector<16x128xf32>
    %3 = tpu.matmul %2, %0, %cst {dimension_numbers = #tpu.dot_dimension_numbers<[1], [0], [0], [1], [0, 0, 1, 1], [], []>} : vector<16x288xbf16>, vector<288x128xbf16>, vector<16x128xf32> -> vector<16x128xf32>
    %c1 = arith.constant 1 : index
    %c0_4 = arith.constant 0 : index
    %c0_5 = arith.constant 0 : index
    %4 = vector.load %arg1[%c1, %c0_4, %c0_5] : memref<4x16x288xbf16, #tpu.memory_space<vmem>>, vector<1x16x288xbf16>
    %5 = vector.shape_cast %4 : vector<1x16x288xbf16> to vector<16x288xbf16>
    %cst_6 = arith.constant dense<0.000000e+00> : vector<16x128xf32>
    %6 = tpu.matmul %5, %0, %cst_6 {dimension_numbers = #tpu.dot_dimension_numbers<[1], [0], [0], [1], [0, 0, 1, 1], [], []>} : vector<16x288xbf16>, vector<288x128xbf16>, vector<16x128xf32> -> vector<16x128xf32>
    %c2 = arith.constant 2 : index
    %c0_7 = arith.constant 0 : index
    %c0_8 = arith.constant 0 : index
    %7 = vector.load %arg1[%c2, %c0_7, %c0_8] : memref<4x16x288xbf16, #tpu.memory_space<vmem>>, vector<1x16x288xbf16>
    %8 = vector.shape_cast %7 : vector<1x16x288xbf16> to vector<16x288xbf16>
    %cst_9 = arith.constant dense<0.000000e+00> : vector<16x128xf32>
    %9 = tpu.matmul %8, %0, %cst_9 {dimension_numbers = #tpu.dot_dimension_numbers<[1], [0], [0], [1], [0, 0, 1, 1], [], []>} : vector<16x288xbf16>, vector<288x128xbf16>, vector<16x128xf32> -> vector<16x128xf32>
    %c3 = arith.constant 3 : index
    %c0_10 = arith.constant 0 : index
    %c0_11 = arith.constant 0 : index
    %10 = vector.load %arg1[%c3, %c0_10, %c0_11] : memref<4x16x288xbf16, #tpu.memory_space<vmem>>, vector<1x16x288xbf16>
    %11 = vector.shape_cast %10 : vector<1x16x288xbf16> to vector<16x288xbf16>
    %cst_12 = arith.constant dense<0.000000e+00> : vector<16x128xf32>
    %12 = tpu.matmul %11, %0, %cst_12 {dimension_numbers = #tpu.dot_dimension_numbers<[1], [0], [0], [1], [0, 0, 1, 1], [], []>} : vector<16x288xbf16>, vector<288x128xbf16>, vector<16x128xf32> -> vector<16x128xf32>
    %13 = arith.maximumf %3, %6 : vector<16x128xf32>
    %14 = arith.maximumf %9, %12 : vector<16x128xf32>
    %15 = arith.maximumf %13, %14 : vector<16x128xf32>
    %c0_13 = arith.constant 0 : index
    %c0_14 = arith.constant 0 : index
    %16 = vector.load %arg3[%c0_13, %c0_14] : memref<1x128xf32, #tpu.memory_space<vmem>>, vector<1x128xf32>
    %17 = vector.broadcast %16 : vector<1x128xf32> to vector<16x128xf32>
    %18 = arith.addf %15, %17 : vector<16x128xf32>
    %cst_15 = arith.constant 0.000000e+00 : f32
    %19 = vector.broadcast %cst_15 : f32 to vector<16x128xf32>
    %20 = arith.maximumf %18, %19 : vector<16x128xf32>
    %21 = arith.truncf %20 : vector<16x128xf32> to vector<16x128xbf16>
    %c0_16 = arith.constant 0 : index
    %c0_17 = arith.constant 0 : index
    %22 = vector.load %arg4[%c0_16, %c0_17] : memref<16x128xbf16, #tpu.memory_space<vmem>>, vector<16x128xbf16>
    tpu.vector_store %arg4[%c0_16, %c0_17], %21 {strides = array<i32>} : memref<16x128xbf16, #tpu.memory_space<vmem>>, vector<16x128xbf16>,
    return
  }
  func.func @transform_0(%arg0: i32) -> (i32, i32, i32) {
    %c0_i32 = arith.constant 0 : i32
    %c0_i32_0 = arith.constant 0 : i32
    %c0_i32_1 = arith.constant 0 : i32
    return %c0_i32, %arg0, %c0_i32_0 : i32, i32, i32
  }
  func.func @transform_1(%arg0: i32) -> (i32, i32) {
    %c0_i32 = arith.constant 0 : i32
    %c0_i32_0 = arith.constant 0 : i32
    %c0_i32_1 = arith.constant 0 : i32
    return %c0_i32, %c0_i32_0 : i32, i32
  }
  func.func @transform_2(%arg0: i32) -> (i32, i32) {
    %c0_i32 = arith.constant 0 : i32
    %c0_i32_0 = arith.constant 0 : i32
    %c0_i32_1 = arith.constant 0 : i32
    return %c0_i32, %c0_i32_0 : i32, i32
  }
  func.func @transform_3(%arg0: i32) -> (i32, i32) {
    %c0_i32 = arith.constant 0 : i32
    %c0_i32_0 = arith.constant 0 : i32
    return %arg0, %c0_i32 : i32, i32
  }
}

module attributes {stable_mosaic.version = 11 : i64} {
  func.func @head_kernel(%arg0: i32, %arg1: memref<1x256xbf16, #tpu.memory_space<vmem>>, %arg2: memref<256x128xbf16, #tpu.memory_space<vmem>>, %arg3: memref<1x128xf32, #tpu.memory_space<vmem>>, %arg4: memref<128x20xf32, #tpu.memory_space<vmem>>, %arg5: memref<1x20xf32, #tpu.memory_space<vmem>>, %arg6: memref<20x5xf32, #tpu.memory_space<vmem>>, %arg7: memref<1x5xf32, #tpu.memory_space<vmem>>, %arg8: memref<1x5xf32, #tpu.memory_space<vmem>>, %arg9: memref<1x128xf32, #tpu.memory_space<vmem>>) attributes {dimension_semantics = [#tpu.dimension_semantics<arbitrary>], iteration_bounds = array<i64: 1>, scalar_prefetch = 0 : i64, scratch_operands = 1 : i64, tpu.core_type = #tpu.core_type<tc>, window_params = [{transform_indices = @transform_0, window_bounds = array<i64: 1, 256>}, {transform_indices = @transform_1, window_bounds = array<i64: 256, 128>}, {pipeline_mode = #tpu.pipeline_mode<synchronous>, transform_indices = @transform_2, window_bounds = array<i64: 1, 128>}, {pipeline_mode = #tpu.pipeline_mode<synchronous>, transform_indices = @transform_3, window_bounds = array<i64: 128, 20>}, {pipeline_mode = #tpu.pipeline_mode<synchronous>, transform_indices = @transform_4, window_bounds = array<i64: 1, 20>}, {pipeline_mode = #tpu.pipeline_mode<synchronous>, transform_indices = @transform_5, window_bounds = array<i64: 20, 5>}, {pipeline_mode = #tpu.pipeline_mode<synchronous>, transform_indices = @transform_6, window_bounds = array<i64: 1, 5>}, {pipeline_mode = #tpu.pipeline_mode<synchronous>, transform_indices = @transform_7, window_bounds = array<i64: 1, 5>}]} {
    %c0_i32 = arith.constant 0 : i32
    %0 = arith.cmpi eq, %arg0, %c0_i32 : i32
    %1 = arith.extui %0 : i1 to i32
    %c0_i32_0 = arith.constant 0 : i32
    %2 = arith.cmpi ne, %1, %c0_i32_0 : i32
    scf.if %2 {
      %cst_10 = arith.constant 0.000000e+00 : f32
      %12 = vector.broadcast %cst_10 : f32 to vector<1x128xf32>
      %c0_11 = arith.constant 0 : index
      %c0_12 = arith.constant 0 : index
      %13 = vector.load %arg9[%c0_11, %c0_12] : memref<1x128xf32, #tpu.memory_space<vmem>>, vector<1x128xf32>
      tpu.vector_store %arg9[%c0_11, %c0_12], %12 {strides = array<i32>} : memref<1x128xf32, #tpu.memory_space<vmem>>, vector<1x128xf32>,
    } else {
    }
    %c0 = arith.constant 0 : index
    %c0_1 = arith.constant 0 : index
    %3 = vector.load %arg9[%c0, %c0_1] : memref<1x128xf32, #tpu.memory_space<vmem>>, vector<1x128xf32>
    %c0_2 = arith.constant 0 : index
    %c0_3 = arith.constant 0 : index
    %4 = vector.load %arg1[%c0_2, %c0_3] : memref<1x256xbf16, #tpu.memory_space<vmem>>, vector<1x256xbf16>
    %c0_4 = arith.constant 0 : index
    %c0_5 = arith.constant 0 : index
    %5 = vector.load %arg2[%c0_4, %c0_5] : memref<256x128xbf16, #tpu.memory_space<vmem>>, vector<256x128xbf16>
    %cst = arith.constant dense<0.000000e+00> : vector<1x128xf32>
    %6 = tpu.matmul %4, %5, %cst {dimension_numbers = #tpu.dot_dimension_numbers<[1], [0], [0], [1], [0, 0, 1, 1], [], []>} : vector<1x256xbf16>, vector<256x128xbf16>, vector<1x128xf32> -> vector<1x128xf32>
    %7 = arith.addf %3, %6 : vector<1x128xf32>
    %c0_6 = arith.constant 0 : index
    %c0_7 = arith.constant 0 : index
    %8 = vector.load %arg9[%c0_6, %c0_7] : memref<1x128xf32, #tpu.memory_space<vmem>>, vector<1x128xf32>
    tpu.vector_store %arg9[%c0_6, %c0_7], %7 {strides = array<i32>} : memref<1x128xf32, #tpu.memory_space<vmem>>, vector<1x128xf32>,
    %c0_i32_8 = arith.constant 0 : i32
    %9 = arith.cmpi eq, %arg0, %c0_i32_8 : i32
    %10 = arith.extui %9 : i1 to i32
    %c0_i32_9 = arith.constant 0 : i32
    %11 = arith.cmpi ne, %10, %c0_i32_9 : i32
    scf.if %11 {
      %c0_10 = arith.constant 0 : index
      %c0_11 = arith.constant 0 : index
      %12 = vector.load %arg9[%c0_10, %c0_11] : memref<1x128xf32, #tpu.memory_space<vmem>>, vector<1x128xf32>
      %c0_12 = arith.constant 0 : index
      %c0_13 = arith.constant 0 : index
      %13 = vector.load %arg3[%c0_12, %c0_13] : memref<1x128xf32, #tpu.memory_space<vmem>>, vector<1x128xf32>
      %14 = arith.addf %12, %13 : vector<1x128xf32>
      %cst_14 = arith.constant 0.000000e+00 : f32
      %15 = vector.broadcast %cst_14 : f32 to vector<1x128xf32>
      %16 = arith.maximumf %14, %15 : vector<1x128xf32>
      %c0_15 = arith.constant 0 : index
      %c0_16 = arith.constant 0 : index
      %17 = vector.load %arg4[%c0_15, %c0_16] : memref<128x20xf32, #tpu.memory_space<vmem>>, vector<128x20xf32>
      %cst_17 = arith.constant dense<0.000000e+00> : vector<1x20xf32>
      %18 = tpu.matmul %16, %17, %cst_17 {dimension_numbers = #tpu.dot_dimension_numbers<[1], [0], [0], [1], [0, 0, 1, 1], [], []>} : vector<1x128xf32>, vector<128x20xf32>, vector<1x20xf32> -> vector<1x20xf32>
      %c0_18 = arith.constant 0 : index
      %c0_19 = arith.constant 0 : index
      %19 = vector.load %arg5[%c0_18, %c0_19] : memref<1x20xf32, #tpu.memory_space<vmem>>, vector<1x20xf32>
      %20 = arith.addf %18, %19 : vector<1x20xf32>
      %cst_20 = arith.constant 0.000000e+00 : f32
      %21 = vector.broadcast %cst_20 : f32 to vector<1x20xf32>
      %22 = arith.maximumf %20, %21 : vector<1x20xf32>
      %c0_21 = arith.constant 0 : index
      %c0_22 = arith.constant 0 : index
      %23 = vector.load %arg6[%c0_21, %c0_22] : memref<20x5xf32, #tpu.memory_space<vmem>>, vector<20x5xf32>
      %cst_23 = arith.constant dense<0.000000e+00> : vector<1x5xf32>
      %24 = tpu.matmul %22, %23, %cst_23 {dimension_numbers = #tpu.dot_dimension_numbers<[1], [0], [0], [1], [0, 0, 1, 1], [], []>} : vector<1x20xf32>, vector<20x5xf32>, vector<1x5xf32> -> vector<1x5xf32>
      %c0_24 = arith.constant 0 : index
      %c0_25 = arith.constant 0 : index
      %25 = vector.load %arg7[%c0_24, %c0_25] : memref<1x5xf32, #tpu.memory_space<vmem>>, vector<1x5xf32>
      %26 = arith.addf %24, %25 : vector<1x5xf32>
      %27 = arith.negf %26 : vector<1x5xf32>
      %28 = math.exp %27 : vector<1x5xf32>
      %cst_26 = arith.constant 1.000000e+00 : f32
      %29 = vector.broadcast %cst_26 : f32 to vector<1x5xf32>
      %30 = arith.addf %29, %28 : vector<1x5xf32>
      %31 = arith.divf %29, %30 : vector<1x5xf32>
      %cst_27 = arith.constant 4.000000e+00 : f32
      %32 = vector.broadcast %cst_27 : f32 to vector<1x5xf32>
      %33 = arith.mulf %31, %32 : vector<1x5xf32>
      %c0_28 = arith.constant 0 : index
      %c0_29 = arith.constant 0 : index
      %34 = vector.load %arg8[%c0_28, %c0_29] : memref<1x5xf32, #tpu.memory_space<vmem>>, vector<1x5xf32>
      tpu.vector_store %arg8[%c0_28, %c0_29], %33 {strides = array<i32>} : memref<1x5xf32, #tpu.memory_space<vmem>>, vector<1x5xf32>,
    } else {
    }
    return
  }
  func.func @transform_0(%arg0: i32) -> (i32, i32) {
    %c0_i32 = arith.constant 0 : i32
    %c0_i32_0 = arith.constant 0 : i32
    return %c0_i32, %arg0 : i32, i32
  }
  func.func @transform_1(%arg0: i32) -> (i32, i32) {
    %c0_i32 = arith.constant 0 : i32
    %c0_i32_0 = arith.constant 0 : i32
    return %arg0, %c0_i32 : i32, i32
  }
  func.func @transform_2(%arg0: i32) -> (i32, i32) {
    %c0_i32 = arith.constant 0 : i32
    %c0_i32_0 = arith.constant 0 : i32
    %c0_i32_1 = arith.constant 0 : i32
    return %c0_i32, %c0_i32_0 : i32, i32
  }
  func.func @transform_3(%arg0: i32) -> (i32, i32) {
    %c0_i32 = arith.constant 0 : i32
    %c0_i32_0 = arith.constant 0 : i32
    %c0_i32_1 = arith.constant 0 : i32
    return %c0_i32, %c0_i32_0 : i32, i32
  }
  func.func @transform_4(%arg0: i32) -> (i32, i32) {
    %c0_i32 = arith.constant 0 : i32
    %c0_i32_0 = arith.constant 0 : i32
    %c0_i32_1 = arith.constant 0 : i32
    return %c0_i32, %c0_i32_0 : i32, i32
  }
  func.func @transform_5(%arg0: i32) -> (i32, i32) {
    %c0_i32 = arith.constant 0 : i32
    %c0_i32_0 = arith.constant 0 : i32
    %c0_i32_1 = arith.constant 0 : i32
    return %c0_i32, %c0_i32_0 : i32, i32
  }
  func.func @transform_6(%arg0: i32) -> (i32, i32) {
    %c0_i32 = arith.constant 0 : i32
    %c0_i32_0 = arith.constant 0 : i32
    %c0_i32_1 = arith.constant 0 : i32
    return %c0_i32, %c0_i32_0 : i32, i32
  }
  func.func @transform_7(%arg0: i32) -> (i32, i32) {
    %c0_i32 = arith.constant 0 : i32
    %c0_i32_0 = arith.constant 0 : i32
    %c0_i32_1 = arith.constant 0 : i32
    return %c0_i32, %c0_i32_0 : i32, i32
  }
}

</mosaic_0001>

<llo_original>
// kernel: shapenet_forward.3
$region0: #{shapenet_forward.3}
  #allocation0 [shape = 'u32[]', space=smem, size = 0x4, offset = 0x4, fixed_abs, tag = 'smem constant byte address 0x4 - core index']
  #allocation1 [shape = 'u32[144,128]{1,0:T(1,128)}', space=vmem, size = 0x12000, scoped, tag = 'internal scratch']
  %s0 = inlined_call_operand.vmem [shape: bf16[4,112,9], index: 0, kind: input, shape index: {}]
  %s1 = inlined_call_operand.vmem [shape: bf16[9,128], index: 1, kind: input, shape index: {}]
  %s2 = inlined_call_operand.vmem [shape: f32[1,128], index: 2, kind: input, shape index: {}]
  %s3 = inlined_call_operand.vmem [shape: bf16[112,128], index: 3, kind: output, shape index: {}]
  %s4 = sld [smem:[#allocation0]]
  $region22: #{shapenet_forward.3} parent=0
    _
  %s6 = ssub.s32 1, %s4
  %s7 = scalar_select 0, %s6, %s4
  // Predicated region
  $region2: #{shapenet_forward.3} parent=0 // pred_check
    _
  $region3: #{shapenet_forward.3} parent=0 // pred_check_branch
    %9 = sbr.rel (0) target = $region5
  $region4: #{shapenet_forward.3} parent=0 // pred_region
    _
  $region5: #{shapenet_forward.3} parent=0 // pred_fallthru
    _
  // Predicated region
  $region6: #{shapenet_forward.3} parent=0 // pred_check
    _
  $region7: #{shapenet_forward.3} parent=0 // pred_check_branch
    %11 = sbr.rel (0) target = $region9
  $region8: #{shapenet_forward.3} parent=0 // pred_region
    _
  $region9: #{shapenet_forward.3} parent=0 // pred_fallthru
    _
  // Predicated region
  $region10: #{shapenet_forward.3} parent=0 // pred_check
    _
  $region11: #{shapenet_forward.3} parent=0 // pred_check_branch
    %13 = sbr.rel (0) target = $region13
  $region12: #{shapenet_forward.3} parent=0 // pred_region
    _
  $region13: #{shapenet_forward.3} parent=0 // pred_fallthru
    _
  %v15 = vld [vmem:[%s1] sm:$0xf]
  %v16 = vld [vmem:[%s1 + $0x4] sm:$0x1]
  %v17 = vld [vmem:[%s0] sm:$0xf]
  %v18 = vld [vmem:[%s0 + $0x4] sm:$0xf]
  %v19 = vld [vmem:[%s0 + $0x8] sm:$0xf]
  %v20 = vld [vmem:[%s0 + $0xc] sm:$0xf]
  %v21 = vld [vmem:[%s0 + $0x10] sm:$0xf]
  %v22 = vld [vmem:[%s0 + $0x14] sm:$0xf]
  %v23 = vld [vmem:[%s0 + $0x18] sm:$0xf]
  %v24 = vld [vmem:[%s0 + $0x1c] sm:$0xf]
  %v25 = vld [vmem:[%s0 + $0x20] sm:$0xf]
  %v26 = vld [vmem:[%s0 + $0x24] sm:$0xf]
  %v27 = vld [vmem:[%s0 + $0x28] sm:$0xf]
  %v28 = vld [vmem:[%s0 + $0x2c] sm:$0xf]
  %v29 = vld [vmem:[%s0 + $0x30] sm:$0xf]
  %v30 = vld [vmem:[%s0 + $0x34] sm:$0xf]
  %v45 = vunpack.c.l.b16 %v17
  %v46 = vunpack.c.l.b16 %v18
  %v47 = vunpack.c.l.b16 %v19
  %v48 = vunpack.c.l.b16 %v20
  %v49 = vunpack.c.l.b16 %v21
  %v50 = vunpack.c.l.b16 %v22
  %v51 = vunpack.c.l.b16 %v23
  %v52 = vunpack.c.l.b16 %v24
  %v53 = vunpack.c.l.b16 %v25
  %v54 = vunpack.c.l.b16 %v26
  %v55 = vunpack.c.l.b16 %v27
  %v56 = vunpack.c.l.b16 %v28
  %v57 = vunpack.c.l.b16 %v29
  %v58 = vunpack.c.l.b16 %v30
  %v59 = vpack.c.b16 %v46, %v45
  %v60 = vpack.c.b16 %v48, %v47
  %v61 = vpack.c.b16 %v50, %v49
  %v62 = vpack.c.b16 %v52, %v51
  %v63 = vpack.c.b16 %v54, %v53
  %v64 = vpack.c.b16 %v56, %v55
  %v65 = vpack.c.b16 %v58, %v57
  %v68 = vunpack.c.l.b16 %v15
  %v69 = vunpack.c.l.b16 %v16
  %v70 = vpack.c.b16 %v69, %v68
  %vm71 = vcmask 72704
  %v73 = vsel %vm71, %v59, 0
  %v76 = vsel %vm71, %v60, 0
  %v79 = vsel %vm71, %v61, 0
  %v82 = vsel %vm71, %v62, 0
  %v85 = vsel %vm71, %v63, 0
  %v88 = vsel %vm71, %v64, 0
  %v91 = vsel %vm71, %v65, 0
  %vm93 = vcmask 1043456
  %vm94 = vcmask 1044480
  %v95 = vsel %vm93, 4294967295, 65535
  %v96 = vsel %vm94, %v95, 0
  %v98 = vand.u32 %v70, %v96
  %100 = vmatprep.subr.bf16.mxu0 0
  %101 = vmatpush1.bf16.msra.mxu0 %v98
  %102 = vmatprep.subr.bf16.mxu0 0
  %103 = vmatpush1.bf16.msra.mxu0 0
  %104 = vmatprep.subr.bf16.mxu0 0
  %105 = vmatpush1.bf16.msra.mxu0 0
  %106 = vmatprep.subr.bf16.mxu0 0
  %107 = vmatpush1.bf16.msra.mxu0 0
  %108 = vmatprep.subr.bf16.mxu0 0
  %109 = vmatpush1.bf16.msra.mxu0 0
  %110 = vmatprep.subr.bf16.mxu0 0
  %111 = vmatpush1.bf16.msra.mxu0 0
  %112 = vmatprep.subr.bf16.mxu0 0
  %113 = vmatpush1.bf16.msra.mxu0 0
  %114 = vmatprep.subr.bf16.mxu0 0
  %115 = vmatpush1.bf16.msra.mxu0 0
  %116 = vmatprep.subr.bf16.mxu0 0
  %117 = vmatpush1.bf16.msra.mxu0 0
  %118 = vmatprep.subr.bf16.mxu0 0
  %119 = vmatpush1.bf16.msra.mxu0 0
  %120 = vmatprep.subr.bf16.mxu0 0
  %121 = vmatpush1.bf16.msra.mxu0 0
  %122 = vmatprep.subr.bf16.mxu0 0
  %123 = vmatpush1.bf16.msra.mxu0 0
  %124 = vmatprep.subr.bf16.mxu0 0
  %125 = vmatpush1.bf16.msra.mxu0 0
  %126 = vmatprep.subr.bf16.mxu0 0
  %127 = vmatpush1.bf16.msra.mxu0 0
  %128 = vmatprep.subr.bf16.mxu0 0
  %129 = vmatpush1.bf16.msra.mxu0 0
  %130 = vmatprep.subr.bf16.mxu0 0
  %131 = vmatpush1.bf16.msra.mxu0 0
  %132 = vmatprep.mubr.bf16.mxu0 0
  %133 = vmatmul.mubr.bf16.gmra.mrb[0].mxu0 %v73
  %v134 = vpop.f32.mrb[0].mxu0
  %v135 = vadd.f32 0.0, %v134
  %v136 = vpop.f32.mrb[0].mxu0
  %v137 = vpop.f32.mrb[0].mxu0
  %v138 = vadd.f32 0.0, %v137
  %v139 = vpop.f32.mrb[0].mxu0
  %140 = vmatprep.mubr.bf16.mxu0 0
  %141 = vmatmul.mubr.bf16.gmra.mrb[0].mxu0 %v76
  %v142 = vpop.f32.mrb[0].mxu0
  %v143 = vadd.f32 0.0, %v142
  %v144 = vpop.f32.mrb[0].mxu0
  %v145 = vpop.f32.mrb[0].mxu0
  %v146 = vadd.f32 0.0, %v145
  %v147 = vpop.f32.mrb[0].mxu0
  %148 = vmatprep.mubr.bf16.mxu0 0
  %149 = vmatmul.mubr.bf16.gmra.mrb[0].mxu0 %v79
  %v150 = vpop.f32.mrb[0].mxu0
  %v151 = vadd.f32 0.0, %v150
  %v152 = vpop.f32.mrb[0].mxu0
  %v153 = vpop.f32.mrb[0].mxu0
  %v154 = vadd.f32 0.0, %v153
  %v155 = vpop.f32.mrb[0].mxu0
  %156 = vmatprep.mubr.bf16.mxu0 0
  %157 = vmatmul.mubr.bf16.gmra.mrb[0].mxu0 %v82
  %v158 = vpop.f32.mrb[0].mxu0
  %v159 = vadd.f32 0.0, %v158
  %v160 = vpop.f32.mrb[0].mxu0
  %v161 = vpop.f32.mrb[0].mxu0
  %v162 = vadd.f32 0.0, %v161
  %v163 = vpop.f32.mrb[0].mxu0
  %164 = vmatprep.mubr.bf16.mxu0 0
  %165 = vmatmul.mubr.bf16.gmra.mrb[0].mxu0 %v85
  %v166 = vpop.f32.mrb[0].mxu0
  %v167 = vadd.f32 0.0, %v166
  %v168 = vpop.f32.mrb[0].mxu0
  %v169 = vpop.f32.mrb[0].mxu0
  %v170 = vadd.f32 0.0, %v169
  %v171 = vpop.f32.mrb[0].mxu0
  %172 = vmatprep.mubr.bf16.mxu0 0
  %173 = vmatmul.mubr.bf16.gmra.mrb[0].mxu0 %v88
  %v174 = vpop.f32.mrb[0].mxu0
  %v175 = vadd.f32 0.0, %v174
  %v176 = vpop.f32.mrb[0].mxu0
  %v177 = vpop.f32.mrb[0].mxu0
  %v178 = vadd.f32 0.0, %v177
  %v179 = vpop.f32.mrb[0].mxu0
  %180 = vmatprep.mubr.bf16.mxu0 0
  %181 = vmatmul.mubr.bf16.gmra.mrb[0].mxu0 %v91
  %v182 = vpop.f32.mrb[0].mxu0
  %v183 = vadd.f32 0.0, %v182
  %v184 = vpop.f32.mrb[0].mxu0
  %v185 = vpop.f32.mrb[0].mxu0
  %v186 = vadd.f32 0.0, %v185
  %v187 = vpop.f32.mrb[0].mxu0
  %188 = vdwg.mxu0
  %s189 = scalar_lea.vmem %s0, 56
  %v190 = vld [vmem:[%s189] sm:$0xf]
  %v191 = vld [vmem:[%s189 + $0x4] sm:$0xf]
  %v192 = vld [vmem:[%s189 + $0x8] sm:$0xf]
  %v193 = vld [vmem:[%s189 + $0xc] sm:$0xf]
  %v194 = vld [vmem:[%s189 + $0x10] sm:$0xf]
  %v195 = vld [vmem:[%s189 + $0x14] sm:$0xf]
  %v196 = vld [vmem:[%s189 + $0x18] sm:$0xf]
  %v197 = vld [vmem:[%s189 + $0x1c] sm:$0xf]
  %v198 = vld [vmem:[%s189 + $0x20] sm:$0xf]
  %v199 = vld [vmem:[%s189 + $0x24] sm:$0xf]
  %v200 = vld [vmem:[%s189 + $0x28] sm:$0xf]
  %v201 = vld [vmem:[%s189 + $0x2c] sm:$0xf]
  %v202 = vld [vmem:[%s189 + $0x30] sm:$0xf]
  %v203 = vld [vmem:[%s189 + $0x34] sm:$0xf]
  %v218 = vunpack.c.l.b16 %v190
  %v219 = vunpack.c.l.b16 %v191
  %v220 = vunpack.c.l.b16 %v192
  %v221 = vunpack.c.l.b16 %v193
  %v222 = vunpack.c.l.b16 %v194
  %v223 = vunpack.c.l.b16 %v195
  %v224 = vunpack.c.l.b16 %v196
  %v225 = vunpack.c.l.b16 %v197
  %v226 = vunpack.c.l.b16 %v198
  %v227 = vunpack.c.l.b16 %v199
  %v228 = vunpack.c.l.b16 %v200
  %v229 = vunpack.c.l.b16 %v201
  %v230 = vunpack.c.l.b16 %v202
  %v231 = vunpack.c.l.b16 %v203
  %v232 = vpack.c.b16 %v219, %v218
  %v233 = vpack.c.b16 %v221, %v220
  %v234 = vpack.c.b16 %v223, %v222
  %v235 = vpack.c.b16 %v225, %v224
  %v236 = vpack.c.b16 %v227, %v226
  %v237 = vpack.c.b16 %v229, %v228
  %v238 = vpack.c.b16 %v231, %v230
  %v240 = vsel %vm71, %v232, 0
  %v243 = vsel %vm71, %v233, 0
  %v246 = vsel %vm71, %v234, 0
  %v249 = vsel %vm71, %v235, 0
  %v252 = vsel %vm71, %v236, 0
  %v255 = vsel %vm71, %v237, 0
  %v258 = vsel %vm71, %v238, 0
  %260 = vmatprep.subr.bf16.mxu0 0
  %261 = vmatpush1.bf16.msra.mxu0 %v98
  %262 = vmatprep.subr.bf16.mxu0 0
  %263 = vmatpush1.bf16.msra.mxu0 0
  %264 = vmatprep.subr.bf16.mxu0 0
  %265 = vmatpush1.bf16.msra.mxu0 0
  %266 = vmatprep.subr.bf16.mxu0 0
  %267 = vmatpush1.bf16.msra.mxu0 0
  %268 = vmatprep.subr.bf16.mxu0 0
  %269 = vmatpush1.bf16.msra.mxu0 0
  %270 = vmatprep.subr.bf16.mxu0 0
  %271 = vmatpush1.bf16.msra.mxu0 0
  %272 = vmatprep.subr.bf16.mxu0 0
  %273 = vmatpush1.bf16.msra.mxu0 0
  %274 = vmatprep.subr.bf16.mxu0 0
  %275 = vmatpush1.bf16.msra.mxu0 0
  %276 = vmatprep.subr.bf16.mxu0 0
  %277 = vmatpush1.bf16.msra.mxu0 0
  %278 = vmatprep.subr.bf16.mxu0 0
  %279 = vmatpush1.bf16.msra.mxu0 0
  %280 = vmatprep.subr.bf16.mxu0 0
  %281 = vmatpush1.bf16.msra.mxu0 0
  %282 = vmatprep.subr.bf16.mxu0 0
  %283 = vmatpush1.bf16.msra.mxu0 0
  %284 = vmatprep.subr.bf16.mxu0 0
  %285 = vmatpush1.bf16.msra.mxu0 0
  %286 = vmatprep.subr.bf16.mxu0 0
  %287 = vmatpush1.bf16.msra.mxu0 0
  %288 = vmatprep.subr.bf16.mxu0 0
  %289 = vmatpush1.bf16.msra.mxu0 0
  %290 = vmatprep.subr.bf16.mxu0 0
  %291 = vmatpush1.bf16.msra.mxu0 0
  %292 = vmatprep.mubr.bf16.mxu0 0
  %293 = vmatmul.mubr.bf16.gmra.mrb[0].mxu0 %v240
  %v294 = vpop.f32.mrb[0].mxu0
  %v295 = vadd.f32 0.0, %v294
  %v296 = vpop.f32.mrb[0].mxu0
  %v297 = vpop.f32.mrb[0].mxu0
  %v298 = vadd.f32 0.0, %v297
  %v299 = vpop.f32.mrb[0].mxu0
  %300 = vmatprep.mubr.bf16.mxu0 0
  %301 = vmatmul.mubr.bf16.gmra.mrb[0].mxu0 %v243
  %v302 = vpop.f32.mrb[0].mxu0
  %v303 = vadd.f32 0.0, %v302
  %v304 = vpop.f32.mrb[0].mxu0
  %v305 = vpop.f32.mrb[0].mxu0
  %v306 = vadd.f32 0.0, %v305
  %v307 = vpop.f32.mrb[0].mxu0
  %308 = vmatprep.mubr.bf16.mxu0 0
  %309 = vmatmul.mubr.bf16.gmra.mrb[0].mxu0 %v246
  %v310 = vpop.f32.mrb[0].mxu0
  %v311 = vadd.f32 0.0, %v310
  %v312 = vpop.f32.mrb[0].mxu0
  %v313 = vpop.f32.mrb[0].mxu0
  %v314 = vadd.f32 0.0, %v313
  %v315 = vpop.f32.mrb[0].mxu0
  %316 = vmatprep.mubr.bf16.mxu0 0
  %317 = vmatmul.mubr.bf16.gmra.mrb[0].mxu0 %v249
  %v318 = vpop.f32.mrb[0].mxu0
  %v319 = vadd.f32 0.0, %v318
  %v320 = vpop.f32.mrb[0].mxu0
  %v321 = vpop.f32.mrb[0].mxu0
  %v322 = vadd.f32 0.0, %v321
  %v323 = vpop.f32.mrb[0].mxu0
  %324 = vmatprep.mubr.bf16.mxu0 0
  %325 = vmatmul.mubr.bf16.gmra.mrb[0].mxu0 %v252
  %v326 = vpop.f32.mrb[0].mxu0
  %v327 = vadd.f32 0.0, %v326
  %v328 = vpop.f32.mrb[0].mxu0
  %v329 = vpop.f32.mrb[0].mxu0
  %v330 = vadd.f32 0.0, %v329
  %v331 = vpop.f32.mrb[0].mxu0
  %332 = vmatprep.mubr.bf16.mxu0 0
  %333 = vmatmul.mubr.bf16.gmra.mrb[0].mxu0 %v255
  %v334 = vpop.f32.mrb[0].mxu0
  %v335 = vadd.f32 0.0, %v334
  %v336 = vpop.f32.mrb[0].mxu0
  %v337 = vpop.f32.mrb[0].mxu0
  %v338 = vadd.f32 0.0, %v337
  %v339 = vpop.f32.mrb[0].mxu0
  %340 = vmatprep.mubr.bf16.mxu0 0
  %341 = vmatmul.mubr.bf16.gmra.mrb[0].mxu0 %v258
  %v342 = vpop.f32.mrb[0].mxu0
  %v343 = vadd.f32 0.0, %v342
  %v344 = vpop.f32.mrb[0].mxu0
  %v345 = vpop.f32.mrb[0].mxu0
  %v346 = vadd.f32 0.0, %v345
  %v347 = vpop.f32.mrb[0].mxu0
  %348 = vdwg.mxu0
  %s349 = scalar_lea.vmem %s0, 112
  %v350 = vld [vmem:[%s349] sm:$0xf]
  %v351 = vld [vmem:[%s349 + $0x4] sm:$0xf]
  %v352 = vld [vmem:[%s349 + $0x8] sm:$0xf]
  %v353 = vld [vmem:[%s349 + $0xc] sm:$0xf]
  %v354 = vld [vmem:[%s349 + $0x10] sm:$0xf]
  %v355 = vld [vmem:[%s349 + $0x14] sm:$0xf]
  %v356 = vld [vmem:[%s349 + $0x18] sm:$0xf]
  %v357 = vld [vmem:[%s349 + $0x1c] sm:$0xf]
  %v358 = vld [vmem:[%s349 + $0x20] sm:$0xf]
  %v359 = vld [vmem:[%s349 + $0x24] sm:$0xf]
  %v360 = vld [vmem:[%s349 + $0x28] sm:$0xf]
  %v361 = vld [vmem:[%s349 + $0x2c] sm:$0xf]
  %v362 = vld [vmem:[%s349 + $0x30] sm:$0xf]
  %v363 = vld [vmem:[%s349 + $0x34] sm:$0xf]
  %v378 = vunpack.c.l.b16 %v350
  %v379 = vunpack.c.l.b16 %v351
  %v380 = vunpack.c.l.b16 %v352
  %v381 = vunpack.c.l.b16 %v353
  %v382 = vunpack.c.l.b16 %v354
  %v383 = vunpack.c.l.b16 %v355
  %v384 = vunpack.c.l.b16 %v356
  %v385 = vunpack.c.l.b16 %v357
  %v386 = vunpack.c.l.b16 %v358
  %v387 = vunpack.c.l.b16 %v359
  %v388 = vunpack.c.l.b16 %v360
  %v389 = vunpack.c.l.b16 %v361
  %v390 = vunpack.c.l.b16 %v362
  %v391 = vunpack.c.l.b16 %v363
  %v392 = vpack.c.b16 %v379, %v378
  %v393 = vpack.c.b16 %v381, %v380
  %v394 = vpack.c.b16 %v383, %v382
  %v395 = vpack.c.b16 %v385, %v384
  %v396 = vpack.c.b16 %v387, %v386
  %v397 = vpack.c.b16 %v389, %v388
  %v398 = vpack.c.b16 %v391, %v390
  %v400 = vsel %vm71, %v392, 0
  %v403 = vsel %vm71, %v393, 0
  %v406 = vsel %vm71, %v394, 0
  %v409 = vsel %vm71, %v395, 0
  %v412 = vsel %vm71, %v396, 0
  %v415 = vsel %vm71, %v397, 0
  %v418 = vsel %vm71, %v398, 0
  %420 = vmatprep.subr.bf16.mxu0 0
  %421 = vmatpush1.bf16.msra.mxu0 %v98
  %422 = vmatprep.subr.bf16.mxu0 0
  %423 = vmatpush1.bf16.msra.mxu0 0
  %424 = vmatprep.subr.bf16.mxu0 0
  %425 = vmatpush1.bf16.msra.mxu0 0
  %426 = vmatprep.subr.bf16.mxu0 0
  %427 = vmatpush1.bf16.msra.mxu0 0
  %428 = vmatprep.subr.bf16.mxu0 0
  %429 = vmatpush1.bf16.msra.mxu0 0
  %430 = vmatprep.subr.bf16.mxu0 0
  %431 = vmatpush1.bf16.msra.mxu0 0
  %432 = vmatprep.subr.bf16.mxu0 0
  %433 = vmatpush1.bf16.msra.mxu0 0
  %434 = vmatprep.subr.bf16.mxu0 0
  %435 = vmatpush1.bf16.msra.mxu0 0
  %436 = vmatprep.subr.bf16.mxu0 0
  %437 = vmatpush1.bf16.msra.mxu0 0
  %438 = vmatprep.subr.bf16.mxu0 0
  %439 = vmatpush1.bf16.msra.mxu0 0
  %440 = vmatprep.subr.bf16.mxu0 0
  %441 = vmatpush1.bf16.msra.mxu0 0
  %442 = vmatprep.subr.bf16.mxu0 0
  %443 = vmatpush1.bf16.msra.mxu0 0
  %444 = vmatprep.subr.bf16.mxu0 0
  %445 = vmatpush1.bf16.msra.mxu0 0
  %446 = vmatprep.subr.bf16.mxu0 0
  %447 = vmatpush1.bf16.msra.mxu0 0
  %448 = vmatprep.subr.bf16.mxu0 0
  %449 = vmatpush1.bf16.msra.mxu0 0
  %450 = vmatprep.subr.bf16.mxu0 0
  %451 = vmatpush1.bf16.msra.mxu0 0
  %452 = vmatprep.mubr.bf16.mxu0 0
  %453 = vmatmul.mubr.bf16.gmra.mrb[0].mxu0 %v400
  %v454 = vpop.f32.mrb[0].mxu0
  %v455 = vadd.f32 0.0, %v454
  %v456 = vpop.f32.mrb[0].mxu0
  %v457 = vpop.f32.mrb[0].mxu0
  %v458 = vadd.f32 0.0, %v457
  %v459 = vpop.f32.mrb[0].mxu0
  %460 = vmatprep.mubr.bf16.mxu0 0
  %461 = vmatmul.mubr.bf16.gmra.mrb[0].mxu0 %v403
  %v462 = vpop.f32.mrb[0].mxu0
  %v463 = vadd.f32 0.0, %v462
  %v464 = vpop.f32.mrb[0].mxu0
  %v465 = vpop.f32.mrb[0].mxu0
  %v466 = vadd.f32 0.0, %v465
  %v467 = vpop.f32.mrb[0].mxu0
  %468 = vmatprep.mubr.bf16.mxu0 0
  %469 = vmatmul.mubr.bf16.gmra.mrb[0].mxu0 %v406
  %v470 = vpop.f32.mrb[0].mxu0
  %v471 = vadd.f32 0.0, %v470
  %v472 = vpop.f32.mrb[0].mxu0
  %v473 = vpop.f32.mrb[0].mxu0
  %v474 = vadd.f32 0.0, %v473
  %v475 = vpop.f32.mrb[0].mxu0
  %476 = vmatprep.mubr.bf16.mxu0 0
  %477 = vmatmul.mubr.bf16.gmra.mrb[0].mxu0 %v409
  %v478 = vpop.f32.mrb[0].mxu0
  %v479 = vadd.f32 0.0, %v478
  %v480 = vpop.f32.mrb[0].mxu0
  %v481 = vpop.f32.mrb[0].mxu0
  %v482 = vadd.f32 0.0, %v481
  %v483 = vpop.f32.mrb[0].mxu0
  %484 = vmatprep.mubr.bf16.mxu0 0
  %485 = vmatmul.mubr.bf16.gmra.mrb[0].mxu0 %v412
  %v486 = vpop.f32.mrb[0].mxu0
  %v487 = vadd.f32 0.0, %v486
  %v488 = vpop.f32.mrb[0].mxu0
  %v489 = vpop.f32.mrb[0].mxu0
  %v490 = vadd.f32 0.0, %v489
  %v491 = vpop.f32.mrb[0].mxu0
  %492 = vmatprep.mubr.bf16.mxu0 0
  %493 = vmatmul.mubr.bf16.gmra.mrb[0].mxu0 %v415
  %v494 = vpop.f32.mrb[0].mxu0
  %v495 = vadd.f32 0.0, %v494
  %v496 = vpop.f32.mrb[0].mxu0
  %v497 = vpop.f32.mrb[0].mxu0
  %v498 = vadd.f32 0.0, %v497
  %v499 = vpop.f32.mrb[0].mxu0
  %500 = vmatprep.mubr.bf16.mxu0 0
  %501 = vmatmul.mubr.bf16.gmra.mrb[0].mxu0 %v418
  %v502 = vpop.f32.mrb[0].mxu0
  %v503 = vadd.f32 0.0, %v502
  %v504 = vpop.f32.mrb[0].mxu0
  %v505 = vpop.f32.mrb[0].mxu0
  %v506 = vadd.f32 0.0, %v505
  %v507 = vpop.f32.mrb[0].mxu0
  %508 = vdwg.mxu0
  %s509 = scalar_lea.vmem %s0, 168
  %v510 = vld [vmem:[%s509] sm:$0xf]
  %v511 = vld [vmem:[%s509 + $0x4] sm:$0xf]
  %v512 = vld [vmem:[%s509 + $0x8] sm:$0xf]
  %v513 = vld [vmem:[%s509 + $0xc] sm:$0xf]
  %v514 = vld [vmem:[%s509 + $0x10] sm:$0xf]
  %v515 = vld [vmem:[%s509 + $0x14] sm:$0xf]
  %v516 = vld [vmem:[%s509 + $0x18] sm:$0xf]
  %v517 = vld [vmem:[%s509 + $0x1c] sm:$0xf]
  %v518 = vld [vmem:[%s509 + $0x20] sm:$0xf]
  %v519 = vld [vmem:[%s509 + $0x24] sm:$0xf]
  %v520 = vld [vmem:[%s509 + $0x28] sm:$0xf]
  %v521 = vld [vmem:[%s509 + $0x2c] sm:$0xf]
  %v522 = vld [vmem:[%s509 + $0x30] sm:$0xf]
  %v523 = vld [vmem:[%s509 + $0x34] sm:$0xf]
  %v538 = vunpack.c.l.b16 %v510
  %v539 = vunpack.c.l.b16 %v511
  %v540 = vunpack.c.l.b16 %v512
  %v541 = vunpack.c.l.b16 %v513
  %v542 = vunpack.c.l.b16 %v514
  %v543 = vunpack.c.l.b16 %v515
  %v544 = vunpack.c.l.b16 %v516
  %v545 = vunpack.c.l.b16 %v517
  %v546 = vunpack.c.l.b16 %v518
  %v547 = vunpack.c.l.b16 %v519
  %v548 = vunpack.c.l.b16 %v520
  %v549 = vunpack.c.l.b16 %v521
  %v550 = vunpack.c.l.b16 %v522
  %v551 = vunpack.c.l.b16 %v523
  %v552 = vpack.c.b16 %v539, %v538
  %v553 = vpack.c.b16 %v541, %v540
  %v554 = vpack.c.b16 %v543, %v542
  %v555 = vpack.c.b16 %v545, %v544
  %v556 = vpack.c.b16 %v547, %v546
  %v557 = vpack.c.b16 %v549, %v548
  %v558 = vpack.c.b16 %v551, %v550
  %v560 = vsel %vm71, %v552, 0
  %v563 = vsel %vm71, %v553, 0
  %v566 = vsel %vm71, %v554, 0
  %v569 = vsel %vm71, %v555, 0
  %v572 = vsel %vm71, %v556, 0
  %v575 = vsel %vm71, %v557, 0
  %v578 = vsel %vm71, %v558, 0
  %580 = vmatprep.subr.bf16.mxu0 0
  %581 = vmatpush1.bf16.msra.mxu0 %v98
  %582 = vmatprep.subr.bf16.mxu0 0
  %583 = vmatpush1.bf16.msra.mxu0 0
  %584 = vmatprep.subr.bf16.mxu0 0
  %585 = vmatpush1.bf16.msra.mxu0 0
  %586 = vmatprep.subr.bf16.mxu0 0
  %587 = vmatpush1.bf16.msra.mxu0 0
  %588 = vmatprep.subr.bf16.mxu0 0
  %589 = vmatpush1.bf16.msra.mxu0 0
  %590 = vmatprep.subr.bf16.mxu0 0
  %591 = vmatpush1.bf16.msra.mxu0 0
  %592 = vmatprep.subr.bf16.mxu0 0
  %593 = vmatpush1.bf16.msra.mxu0 0
  %594 = vmatprep.subr.bf16.mxu0 0
  %595 = vmatpush1.bf16.msra.mxu0 0
  %596 = vmatprep.subr.bf16.mxu0 0
  %597 = vmatpush1.bf16.msra.mxu0 0
  %598 = vmatprep.subr.bf16.mxu0 0
  %599 = vmatpush1.bf16.msra.mxu0 0
  %600 = vmatprep.subr.bf16.mxu0 0
  %601 = vmatpush1.bf16.msra.mxu0 0
  %602 = vmatprep.subr.bf16.mxu0 0
  %603 = vmatpush1.bf16.msra.mxu0 0
  %604 = vmatprep.subr.bf16.mxu0 0
  %605 = vmatpush1.bf16.msra.mxu0 0
  %606 = vmatprep.subr.bf16.mxu0 0
  %607 = vmatpush1.bf16.msra.mxu0 0
  %608 = vmatprep.subr.bf16.mxu0 0
  %609 = vmatpush1.bf16.msra.mxu0 0
  %610 = vmatprep.subr.bf16.mxu0 0
  %611 = vmatpush1.bf16.msra.mxu0 0
  %612 = vmatprep.mubr.bf16.mxu0 0
  %613 = vmatmul.mubr.bf16.gmra.mrb[0].mxu0 %v560
  %v614 = vpop.f32.mrb[0].mxu0
  %v615 = vadd.f32 0.0, %v614
  %v616 = vpop.f32.mrb[0].mxu0
  %v617 = vpop.f32.mrb[0].mxu0
  %v618 = vadd.f32 0.0, %v617
  %v619 = vpop.f32.mrb[0].mxu0
  %620 = vmatprep.mubr.bf16.mxu0 0
  %621 = vmatmul.mubr.bf16.gmra.mrb[0].mxu0 %v563
  %v622 = vpop.f32.mrb[0].mxu0
  %v623 = vadd.f32 0.0, %v622
  %v624 = vpop.f32.mrb[0].mxu0
  %v625 = vpop.f32.mrb[0].mxu0
  %v626 = vadd.f32 0.0, %v625
  %v627 = vpop.f32.mrb[0].mxu0
  %628 = vmatprep.mubr.bf16.mxu0 0
  %629 = vmatmul.mubr.bf16.gmra.mrb[0].mxu0 %v566
  %v630 = vpop.f32.mrb[0].mxu0
  %v631 = vadd.f32 0.0, %v630
  %v632 = vpop.f32.mrb[0].mxu0
  %v633 = vpop.f32.mrb[0].mxu0
  %v634 = vadd.f32 0.0, %v633
  %v635 = vpop.f32.mrb[0].mxu0
  %636 = vmatprep.mubr.bf16.mxu0 0
  %637 = vmatmul.mubr.bf16.gmra.mrb[0].mxu0 %v569
  %v638 = vpop.f32.mrb[0].mxu0
  %v639 = vadd.f32 0.0, %v638
  %v640 = vpop.f32.mrb[0].mxu0
  %v641 = vpop.f32.mrb[0].mxu0
  %v642 = vadd.f32 0.0, %v641
  %v643 = vpop.f32.mrb[0].mxu0
  %644 = vmatprep.mubr.bf16.mxu0 0
  %645 = vmatmul.mubr.bf16.gmra.mrb[0].mxu0 %v572
  %v646 = vpop.f32.mrb[0].mxu0
  %v647 = vadd.f32 0.0, %v646
  %v648 = vpop.f32.mrb[0].mxu0
  %v649 = vpop.f32.mrb[0].mxu0
  %v650 = vadd.f32 0.0, %v649
  %v651 = vpop.f32.mrb[0].mxu0
  %652 = vmatprep.mubr.bf16.mxu0 0
  %653 = vmatmul.mubr.bf16.gmra.mrb[0].mxu0 %v575
  %v654 = vpop.f32.mrb[0].mxu0
  %v655 = vadd.f32 0.0, %v654
  %v656 = vpop.f32.mrb[0].mxu0
  %v657 = vpop.f32.mrb[0].mxu0
  %v658 = vadd.f32 0.0, %v657
  %v659 = vpop.f32.mrb[0].mxu0
  %660 = vmatprep.mubr.bf16.mxu0 0
  %661 = vmatmul.mubr.bf16.gmra.mrb[0].mxu0 %v578
  %v662 = vpop.f32.mrb[0].mxu0
  %v663 = vadd.f32 0.0, %v662
  %v664 = vpop.f32.mrb[0].mxu0
  %v665 = vpop.f32.mrb[0].mxu0
  %v666 = vadd.f32 0.0, %v665
  %v667 = vpop.f32.mrb[0].mxu0
  %668 = vdwg.mxu0
  %v669 = vmax.f32 %v135, %v295
  %v670 = vmax.f32 %v138, %v298
  %v671 = vmax.f32 %v143, %v303
  %v672 = vmax.f32 %v146, %v306
  %v673 = vmax.f32 %v151, %v311
  %v674 = vmax.f32 %v154, %v314
  %v675 = vmax.f32 %v159, %v319
  %v676 = vmax.f32 %v162, %v322
  %v677 = vmax.f32 %v167, %v327
  %v678 = vmax.f32 %v170, %v330
  %v679 = vmax.f32 %v175, %v335
  %v680 = vmax.f32 %v178, %v338
  %v681 = vmax.f32 %v183, %v343
  %v682 = vmax.f32 %v186, %v346
  %v683 = vmax.f32 %v455, %v615
  %v684 = vmax.f32 %v458, %v618
  %v685 = vmax.f32 %v463, %v623
  %v686 = vmax.f32 %v466, %v626
  %v687 = vmax.f32 %v471, %v631
  %v688 = vmax.f32 %v474, %v634
  %v689 = vmax.f32 %v479, %v639
  %v690 = vmax.f32 %v482, %v642
  %v691 = vmax.f32 %v487, %v647
  %v692 = vmax.f32 %v490, %v650
  %v693 = vmax.f32 %v495, %v655
  %v694 = vmax.f32 %v498, %v658
  %v695 = vmax.f32 %v503, %v663
  %v696 = vmax.f32 %v506, %v666
  %v697 = vmax.f32 %v669, %v683
  %v698 = vmax.f32 %v670, %v684
  %v699 = vmax.f32 %v671, %v685
  %v700 = vmax.f32 %v672, %v686
  %v701 = vmax.f32 %v673, %v687
  %v702 = vmax.f32 %v674, %v688
  %v703 = vmax.f32 %v675, %v689
  %v704 = vmax.f32 %v676, %v690
  %v705 = vmax.f32 %v677, %v691
  %v706 = vmax.f32 %v678, %v692
  %v707 = vmax.f32 %v679, %v693
  %v708 = vmax.f32 %v680, %v694
  %v709 = vmax.f32 %v681, %v695
  %v710 = vmax.f32 %v682, %v696
  %v711 = vld [vmem:[%s2] sm:$0x1]
  %v713 = vlaneseq
  %v714 = vshrl.u32 %v713, 7
  %v715 = vsub.s32 0, %v714
  %v716 = vrot.slane %v711, %v715
  %v718 = vadd.f32 %v697, %v716
  %v719 = vadd.f32 %v698, %v716
  %v720 = vadd.f32 %v699, %v716
  %v721 = vadd.f32 %v700, %v716
  %v722 = vadd.f32 %v701, %v716
  %v723 = vadd.f32 %v702, %v716
  %v724 = vadd.f32 %v703, %v716
  %v725 = vadd.f32 %v704, %v716
  %v726 = vadd.f32 %v705, %v716
  %v727 = vadd.f32 %v706, %v716
  %v728 = vadd.f32 %v707, %v716
  %v729 = vadd.f32 %v708, %v716
  %v730 = vadd.f32 %v709, %v716
  %v731 = vadd.f32 %v710, %v716
  %v732 = vmax.f32 %v718, 0.0
  %v733 = vmax.f32 %v719, 0.0
  %v734 = vmax.f32 %v720, 0.0
  %v735 = vmax.f32 %v721, 0.0
  %v736 = vmax.f32 %v722, 0.0
  %v737 = vmax.f32 %v723, 0.0
  %v738 = vmax.f32 %v724, 0.0
  %v739 = vmax.f32 %v725, 0.0
  %v740 = vmax.f32 %v726, 0.0
  %v741 = vmax.f32 %v727, 0.0
  %v742 = vmax.f32 %v728, 0.0
  %v743 = vmax.f32 %v729, 0.0
  %v744 = vmax.f32 %v730, 0.0
  %v745 = vmax.f32 %v731, 0.0
  %v746 = vpack.c.bf16 %v733, %v732
  %v747 = vpack.c.bf16 %v735, %v734
  %v748 = vpack.c.bf16 %v737, %v736
  %v749 = vpack.c.bf16 %v739, %v738
  %v750 = vpack.c.bf16 %v741, %v740
  %v751 = vpack.c.bf16 %v743, %v742
  %v752 = vpack.c.bf16 %v745, %v744
  %v760 = vunpack.c.l.b16 %v746
  %v761 = vunpack.c.h.b16 %v746
  %v762 = vunpack.c.l.b16 %v747
  %v763 = vunpack.c.h.b16 %v747
  %v764 = vunpack.c.l.b16 %v748
  %v765 = vunpack.c.h.b16 %v748
  %v766 = vunpack.c.l.b16 %v749
  %v767 = vunpack.c.h.b16 %v749
  %v768 = vunpack.c.l.b16 %v750
  %v769 = vunpack.c.h.b16 %v750
  %v770 = vunpack.c.l.b16 %v751
  %v771 = vunpack.c.h.b16 %v751
  %v772 = vunpack.c.l.b16 %v752
  %v773 = vunpack.c.h.b16 %v752
  %v774 = vpack.c.b16 %v760, %v760
  %v775 = vpack.c.b16 %v761, %v761
  %v776 = vpack.c.b16 %v762, %v762
  %v777 = vpack.c.b16 %v763, %v763
  %v778 = vpack.c.b16 %v764, %v764
  %v779 = vpack.c.b16 %v765, %v765
  %v780 = vpack.c.b16 %v766, %v766
  %v781 = vpack.c.b16 %v767, %v767
  %v782 = vpack.c.b16 %v768, %v768
  %v783 = vpack.c.b16 %v769, %v769
  %v784 = vpack.c.b16 %v770, %v770
  %v785 = vpack.c.b16 %v771, %v771
  %v786 = vpack.c.b16 %v772, %v772
  %v787 = vpack.c.b16 %v773, %v773
  %802 = vst [vmem:[%s3] sm:$0xf] %v774
  %803 = vst [vmem:[%s3 + $0x4] sm:$0xf] %v775
  %804 = vst [vmem:[%s3 + $0x8] sm:$0xf] %v776
  %805 = vst [vmem:[%s3 + $0xc] sm:$0xf] %v777
  %806 = vst [vmem:[%s3 + $0x10] sm:$0xf] %v778
  %807 = vst [vmem:[%s3 + $0x14] sm:$0xf] %v779
  %808 = vst [vmem:[%s3 + $0x18] sm:$0xf] %v780
  %809 = vst [vmem:[%s3 + $0x1c] sm:$0xf] %v781
  %810 = vst [vmem:[%s3 + $0x20] sm:$0xf] %v782
  %811 = vst [vmem:[%s3 + $0x24] sm:$0xf] %v783
  %812 = vst [vmem:[%s3 + $0x28] sm:$0xf] %v784
  %813 = vst [vmem:[%s3 + $0x2c] sm:$0xf] %v785
  %814 = vst [vmem:[%s3 + $0x30] sm:$0xf] %v786
  %815 = vst [vmem:[%s3 + $0x34] sm:$0xf] %v787
  // Predicated region
  $region14: #{shapenet_forward.3} parent=0 // pred_check
    _
  $region15: #{shapenet_forward.3} parent=0 // pred_check_branch
    %817 = sbr.rel (0) target = $region17
  $region16: #{shapenet_forward.3} parent=0 // pred_region
    _
  $region17: #{shapenet_forward.3} parent=0 // pred_fallthru
    _
  // Predicated region
  $region18: #{shapenet_forward.3} parent=0 // pred_check
    _
  $region19: #{shapenet_forward.3} parent=0 // pred_check_branch
    %819 = sbr.rel (0) target = $region21
  $region20: #{shapenet_forward.3} parent=0 // pred_region
    _
  $region21: #{shapenet_forward.3} parent=0 // pred_fallthru
    _

// kernel: shapenet_forward.4
$region0: #{shapenet_forward.4}
  #allocation0 [shape = 'u32[]', space=smem, size = 0x4, offset = 0x4, fixed_abs, tag = 'smem constant byte address 0x4 - core index']
  #allocation1 [shape = 'u32[144,128]{1,0:T(1,128)}', space=vmem, size = 0x12000, scoped, tag = 'internal scratch']
  %s0 = inlined_call_operand.vmem [shape: bf16[4,16,288], index: 0, kind: input, shape index: {}]
  %s1 = inlined_call_operand.vmem [shape: bf16[288,128], index: 1, kind: input, shape index: {}]
  %s2 = inlined_call_operand.vmem [shape: f32[1,128], index: 2, kind: input, shape index: {}]
  %s3 = inlined_call_operand.vmem [shape: bf16[16,128], index: 3, kind: output, shape index: {}]
  %s4 = sld [smem:[#allocation0]]
  $region22: #{shapenet_forward.4} parent=0
    _
  %s6 = ssub.s32 1, %s4
  %s7 = scalar_select 0, %s6, %s4
  // Predicated region
  $region2: #{shapenet_forward.4} parent=0 // pred_check
    _
  $region3: #{shapenet_forward.4} parent=0 // pred_check_branch
    %9 = sbr.rel (0) target = $region5
  $region4: #{shapenet_forward.4} parent=0 // pred_region
    _
  $region5: #{shapenet_forward.4} parent=0 // pred_fallthru
    _
  // Predicated region
  $region6: #{shapenet_forward.4} parent=0 // pred_check
    _
  $region7: #{shapenet_forward.4} parent=0 // pred_check_branch
    %11 = sbr.rel (0) target = $region9
  $region8: #{shapenet_forward.4} parent=0 // pred_region
    _
  $region9: #{shapenet_forward.4} parent=0 // pred_fallthru
    _
  // Predicated region
  $region10: #{shapenet_forward.4} parent=0 // pred_check
    _
  $region11: #{shapenet_forward.4} parent=0 // pred_check_branch
    %13 = sbr.rel (0) target = $region13
  $region12: #{shapenet_forward.4} parent=0 // pred_region
    _
  $region13: #{shapenet_forward.4} parent=0 // pred_fallthru
    _
  %v15 = vld [vmem:[%s1] sm:$0xf]
  %v16 = vld [vmem:[%s1 + $0x4] sm:$0xf]
  %v17 = vld [vmem:[%s1 + $0x8] sm:$0xf]
  %v18 = vld [vmem:[%s1 + $0xc] sm:$0xf]
  %v19 = vld [vmem:[%s1 + $0x10] sm:$0xf]
  %v20 = vld [vmem:[%s1 + $0x14] sm:$0xf]
  %v21 = vld [vmem:[%s1 + $0x18] sm:$0xf]
  %v22 = vld [vmem:[%s1 + $0x1c] sm:$0xf]
  %v23 = vld [vmem:[%s1 + $0x20] sm:$0xf]
  %v24 = vld [vmem:[%s1 + $0x24] sm:$0xf]
  %v25 = vld [vmem:[%s1 + $0x28] sm:$0xf]
  %v26 = vld [vmem:[%s1 + $0x2c] sm:$0xf]
  %v27 = vld [vmem:[%s1 + $0x30] sm:$0xf]
  %v28 = vld [vmem:[%s1 + $0x34] sm:$0xf]
  %v29 = vld [vmem:[%s1 + $0x38] sm:$0xf]
  %v30 = vld [vmem:[%s1 + $0x3c] sm:$0xf]
  %v31 = vld [vmem:[%s1 + $0x40] sm:$0xf]
  %v32 = vld [vmem:[%s1 + $0x44] sm:$0xf]
  %v33 = vld [vmem:[%s1 + $0x48] sm:$0xf]
  %v34 = vld [vmem:[%s1 + $0x4c] sm:$0xf]
  %v35 = vld [vmem:[%s1 + $0x50] sm:$0xf]
  %v36 = vld [vmem:[%s1 + $0x54] sm:$0xf]
  %v37 = vld [vmem:[%s1 + $0x58] sm:$0xf]
  %v38 = vld [vmem:[%s1 + $0x5c] sm:$0xf]
  %v39 = vld [vmem:[%s1 + $0x60] sm:$0xf]
  %v40 = vld [vmem:[%s1 + $0x64] sm:$0xf]
  %v41 = vld [vmem:[%s1 + $0x68] sm:$0xf]
  %v42 = vld [vmem:[%s1 + $0x6c] sm:$0xf]
  %v43 = vld [vmem:[%s1 + $0x70] sm:$0xf]
  %v44 = vld [vmem:[%s1 + $0x74] sm:$0xf]
  %v45 = vld [vmem:[%s1 + $0x78] sm:$0xf]
  %v46 = vld [vmem:[%s1 + $0x7c] sm:$0xf]
  %v47 = vld [vmem:[%s1 + $0x80] sm:$0xf]
  %v48 = vld [vmem:[%s1 + $0x84] sm:$0xf]
  %v49 = vld [vmem:[%s1 + $0x88] sm:$0xf]
  %v50 = vld [vmem:[%s1 + $0x8c] sm:$0xf]
  %v51 = vld [vmem:[%s0] sm:$0xff]
  %v52 = vld [vmem:[%s0 + $0x8] sm:$0xf]
  %v53 = vld [vmem:[%s0 + $0xc] sm:$0xff]
  %v54 = vld [vmem:[%s0 + $0x14] sm:$0xf]
  %v59 = vunpack.c.l.b16 %v51
  %v60 = vunpack.c.h.b16 %v51
  %v61 = vunpack.c.l.b16 %v52
  %v62 = vunpack.c.l.b16 %v53
  %v63 = vunpack.c.h.b16 %v53
  %v64 = vunpack.c.l.b16 %v54
  %v65 = vpack.c.b16 %v62, %v59
  %v66 = vpack.c.b16 %v63, %v60
  %v67 = vpack.c.b16 %v64, %v61
  %v106 = vunpack.c.l.b16 %v15
  %v107 = vunpack.c.l.b16 %v16
  %v108 = vunpack.c.l.b16 %v17
  %v109 = vunpack.c.l.b16 %v18
  %v110 = vunpack.c.l.b16 %v19
  %v111 = vunpack.c.l.b16 %v20
  %v112 = vunpack.c.l.b16 %v21
  %v113 = vunpack.c.l.b16 %v22
  %v114 = vunpack.c.l.b16 %v23
  %v115 = vunpack.c.l.b16 %v24
  %v116 = vunpack.c.l.b16 %v25
  %v117 = vunpack.c.l.b16 %v26
  %v118 = vunpack.c.l.b16 %v27
  %v119 = vunpack.c.l.b16 %v28
  %v120 = vunpack.c.l.b16 %v29
  %v121 = vunpack.c.l.b16 %v30
  %v122 = vunpack.c.l.b16 %v31
  %v123 = vunpack.c.l.b16 %v32
  %v124 = vunpack.c.l.b16 %v33
  %v125 = vunpack.c.l.b16 %v34
  %v126 = vunpack.c.l.b16 %v35
  %v127 = vunpack.c.l.b16 %v36
  %v128 = vunpack.c.l.b16 %v37
  %v129 = vunpack.c.l.b16 %v38
  %v130 = vunpack.c.l.b16 %v39
  %v131 = vunpack.c.l.b16 %v40
  %v132 = vunpack.c.l.b16 %v41
  %v133 = vunpack.c.l.b16 %v42
  %v134 = vunpack.c.l.b16 %v43
  %v135 = vunpack.c.l.b16 %v44
  %v136 = vunpack.c.l.b16 %v45
  %v137 = vunpack.c.l.b16 %v46
  %v138 = vunpack.c.l.b16 %v47
  %v139 = vunpack.c.l.b16 %v48
  %v140 = vunpack.c.l.b16 %v49
  %v141 = vunpack.c.l.b16 %v50
  %v142 = vpack.c.b16 %v107, %v106
  %v143 = vpack.c.b16 %v109, %v108
  %v144 = vpack.c.b16 %v111, %v110
  %v145 = vpack.c.b16 %v113, %v112
  %v146 = vpack.c.b16 %v115, %v114
  %v147 = vpack.c.b16 %v117, %v116
  %v148 = vpack.c.b16 %v119, %v118
  %v149 = vpack.c.b16 %v121, %v120
  %v150 = vpack.c.b16 %v123, %v122
  %v151 = vpack.c.b16 %v125, %v124
  %v152 = vpack.c.b16 %v127, %v126
  %v153 = vpack.c.b16 %v129, %v128
  %v154 = vpack.c.b16 %v131, %v130
  %v155 = vpack.c.b16 %v133, %v132
  %v156 = vpack.c.b16 %v135, %v134
  %v157 = vpack.c.b16 %v137, %v136
  %v158 = vpack.c.b16 %v139, %v138
  %v159 = vpack.c.b16 %v141, %v140
  %vm178 = vcmask 261120
  %v180 = vsel %vm178, %v67, 0
  %182 = vmatprep.subr.bf16.mxu0 0
  %183 = vmatpush1.bf16.msra.mxu0 %v142
  %184 = vmatprep.subr.bf16.mxu0 0
  %185 = vmatpush1.bf16.msra.mxu0 %v143
  %186 = vmatprep.subr.bf16.mxu0 0
  %187 = vmatpush1.bf16.msra.mxu0 %v144
  %188 = vmatprep.subr.bf16.mxu0 0
  %189 = vmatpush1.bf16.msra.mxu0 %v145
  %190 = vmatprep.subr.bf16.mxu0 0
  %191 = vmatpush1.bf16.msra.mxu0 %v146
  %192 = vmatprep.subr.bf16.mxu0 0
  %193 = vmatpush1.bf16.msra.mxu0 %v147
  %194 = vmatprep.subr.bf16.mxu0 0
  %195 = vmatpush1.bf16.msra.mxu0 %v148
  %196 = vmatprep.subr.bf16.mxu0 0
  %197 = vmatpush1.bf16.msra.mxu0 %v149
  %198 = vmatprep.subr.bf16.mxu0 0
  %199 = vmatpush1.bf16.msra.mxu0 %v150
  %200 = vmatprep.subr.bf16.mxu0 0
  %201 = vmatpush1.bf16.msra.mxu0 %v151
  %202 = vmatprep.subr.bf16.mxu0 0
  %203 = vmatpush1.bf16.msra.mxu0 %v152
  %204 = vmatprep.subr.bf16.mxu0 0
  %205 = vmatpush1.bf16.msra.mxu0 %v153
  %206 = vmatprep.subr.bf16.mxu0 0
  %207 = vmatpush1.bf16.msra.mxu0 %v154
  %208 = vmatprep.subr.bf16.mxu0 0
  %209 = vmatpush1.bf16.msra.mxu0 %v155
  %210 = vmatprep.subr.bf16.mxu0 0
  %211 = vmatpush1.bf16.msra.mxu0 %v156
  %212 = vmatprep.subr.bf16.mxu0 0
  %213 = vmatpush1.bf16.msra.mxu0 %v157
  %214 = vmatprep.mubr.bf16.mxu0 %v66
  %215 = vmatmul.mubr.bf16.gmra.mrb[0].mxu0 %v65
  %v216 = vpop.f32.mrb[0].mxu0
  %v217 = vadd.f32 0.0, %v216
  %v218 = vpop.f32.mrb[0].mxu0
  %v219 = vpop.f32.mrb[0].mxu0
  %v220 = vadd.f32 0.0, %v219
  %v221 = vpop.f32.mrb[0].mxu0
  %222 = vdwg.mxu0
  %223 = vmatprep.subr.bf16.mxu0 0
  %224 = vmatpush1.bf16.msra.mxu0 %v158
  %225 = vmatprep.subr.bf16.mxu0 0
  %226 = vmatpush1.bf16.msra.mxu0 %v159
  %227 = vmatprep.subr.bf16.mxu0 0
  %228 = vmatpush1.bf16.msra.mxu0 0
  %229 = vmatprep.subr.bf16.mxu0 0
  %230 = vmatpush1.bf16.msra.mxu0 0
  %231 = vmatprep.subr.bf16.mxu0 0
  %232 = vmatpush1.bf16.msra.mxu0 0
  %233 = vmatprep.subr.bf16.mxu0 0
  %234 = vmatpush1.bf16.msra.mxu0 0
  %235 = vmatprep.subr.bf16.mxu0 0
  %236 = vmatpush1.bf16.msra.mxu0 0
  %237 = vmatprep.subr.bf16.mxu0 0
  %238 = vmatpush1.bf16.msra.mxu0 0
  %239 = vmatprep.subr.bf16.mxu0 0
  %240 = vmatpush1.bf16.msra.mxu0 0
  %241 = vmatprep.subr.bf16.mxu0 0
  %242 = vmatpush1.bf16.msra.mxu0 0
  %243 = vmatprep.subr.bf16.mxu0 0
  %244 = vmatpush1.bf16.msra.mxu0 0
  %245 = vmatprep.subr.bf16.mxu0 0
  %246 = vmatpush1.bf16.msra.mxu0 0
  %247 = vmatprep.subr.bf16.mxu0 0
  %248 = vmatpush1.bf16.msra.mxu0 0
  %249 = vmatprep.subr.bf16.mxu0 0
  %250 = vmatpush1.bf16.msra.mxu0 0
  %251 = vmatprep.subr.bf16.mxu0 0
  %252 = vmatpush1.bf16.msra.mxu0 0
  %253 = vmatprep.subr.bf16.mxu0 0
  %254 = vmatpush1.bf16.msra.mxu0 0
  %255 = vmatprep.mubr.bf16.mxu0 0
  %256 = vmatmul.mubr.bf16.gmra.mrb[0].mxu0 %v180
  %v257 = vpop.f32.mrb[0].mxu0
  %v258 = vadd.f32 %v217, %v257
  %v259 = vpop.f32.mrb[0].mxu0
  %v260 = vpop.f32.mrb[0].mxu0
  %v261 = vadd.f32 %v220, %v260
  %v262 = vpop.f32.mrb[0].mxu0
  %263 = vdwg.mxu0
  %s264 = scalar_lea.vmem %s0, 24
  %v265 = vld [vmem:[%s264] sm:$0xff]
  %v266 = vld [vmem:[%s264 + $0x8] sm:$0xf]
  %v267 = vld [vmem:[%s264 + $0xc] sm:$0xff]
  %v268 = vld [vmem:[%s264 + $0x14] sm:$0xf]
  %v273 = vunpack.c.l.b16 %v265
  %v274 = vunpack.c.h.b16 %v265
  %v275 = vunpack.c.l.b16 %v266
  %v276 = vunpack.c.l.b16 %v267
  %v277 = vunpack.c.h.b16 %v267
  %v278 = vunpack.c.l.b16 %v268
  %v279 = vpack.c.b16 %v276, %v273
  %v280 = vpack.c.b16 %v277, %v274
  %v281 = vpack.c.b16 %v278, %v275
  %v285 = vsel %vm178, %v281, 0
  %287 = vmatprep.subr.bf16.mxu0 0
  %288 = vmatpush1.bf16.msra.mxu0 %v142
  %289 = vmatprep.subr.bf16.mxu0 0
  %290 = vmatpush1.bf16.msra.mxu0 %v143
  %291 = vmatprep.subr.bf16.mxu0 0
  %292 = vmatpush1.bf16.msra.mxu0 %v144
  %293 = vmatprep.subr.bf16.mxu0 0
  %294 = vmatpush1.bf16.msra.mxu0 %v145
  %295 = vmatprep.subr.bf16.mxu0 0
  %296 = vmatpush1.bf16.msra.mxu0 %v146
  %297 = vmatprep.subr.bf16.mxu0 0
  %298 = vmatpush1.bf16.msra.mxu0 %v147
  %299 = vmatprep.subr.bf16.mxu0 0
  %300 = vmatpush1.bf16.msra.mxu0 %v148
  %301 = vmatprep.subr.bf16.mxu0 0
  %302 = vmatpush1.bf16.msra.mxu0 %v149
  %303 = vmatprep.subr.bf16.mxu0 0
  %304 = vmatpush1.bf16.msra.mxu0 %v150
  %305 = vmatprep.subr.bf16.mxu0 0
  %306 = vmatpush1.bf16.msra.mxu0 %v151
  %307 = vmatprep.subr.bf16.mxu0 0
  %308 = vmatpush1.bf16.msra.mxu0 %v152
  %309 = vmatprep.subr.bf16.mxu0 0
  %310 = vmatpush1.bf16.msra.mxu0 %v153
  %311 = vmatprep.subr.bf16.mxu0 0
  %312 = vmatpush1.bf16.msra.mxu0 %v154
  %313 = vmatprep.subr.bf16.mxu0 0
  %314 = vmatpush1.bf16.msra.mxu0 %v155
  %315 = vmatprep.subr.bf16.mxu0 0
  %316 = vmatpush1.bf16.msra.mxu0 %v156
  %317 = vmatprep.subr.bf16.mxu0 0
  %318 = vmatpush1.bf16.msra.mxu0 %v157
  %319 = vmatprep.mubr.bf16.mxu0 %v280
  %320 = vmatmul.mubr.bf16.gmra.mrb[0].mxu0 %v279
  %v321 = vpop.f32.mrb[0].mxu0
  %v322 = vadd.f32 0.0, %v321
  %v323 = vpop.f32.mrb[0].mxu0
  %v324 = vpop.f32.mrb[0].mxu0
  %v325 = vadd.f32 0.0, %v324
  %v326 = vpop.f32.mrb[0].mxu0
  %327 = vdwg.mxu0
  %328 = vmatprep.subr.bf16.mxu0 0
  %329 = vmatpush1.bf16.msra.mxu0 %v158
  %330 = vmatprep.subr.bf16.mxu0 0
  %331 = vmatpush1.bf16.msra.mxu0 %v159
  %332 = vmatprep.subr.bf16.mxu0 0
  %333 = vmatpush1.bf16.msra.mxu0 0
  %334 = vmatprep.subr.bf16.mxu0 0
  %335 = vmatpush1.bf16.msra.mxu0 0
  %336 = vmatprep.subr.bf16.mxu0 0
  %337 = vmatpush1.bf16.msra.mxu0 0
  %338 = vmatprep.subr.bf16.mxu0 0
  %339 = vmatpush1.bf16.msra.mxu0 0
  %340 = vmatprep.subr.bf16.mxu0 0
  %341 = vmatpush1.bf16.msra.mxu0 0
  %342 = vmatprep.subr.bf16.mxu0 0
  %343 = vmatpush1.bf16.msra.mxu0 0
  %344 = vmatprep.subr.bf16.mxu0 0
  %345 = vmatpush1.bf16.msra.mxu0 0
  %346 = vmatprep.subr.bf16.mxu0 0
  %347 = vmatpush1.bf16.msra.mxu0 0
  %348 = vmatprep.subr.bf16.mxu0 0
  %349 = vmatpush1.bf16.msra.mxu0 0
  %350 = vmatprep.subr.bf16.mxu0 0
  %351 = vmatpush1.bf16.msra.mxu0 0
  %352 = vmatprep.subr.bf16.mxu0 0
  %353 = vmatpush1.bf16.msra.mxu0 0
  %354 = vmatprep.subr.bf16.mxu0 0
  %355 = vmatpush1.bf16.msra.mxu0 0
  %356 = vmatprep.subr.bf16.mxu0 0
  %357 = vmatpush1.bf16.msra.mxu0 0
  %358 = vmatprep.subr.bf16.mxu0 0
  %359 = vmatpush1.bf16.msra.mxu0 0
  %360 = vmatprep.mubr.bf16.mxu0 0
  %361 = vmatmul.mubr.bf16.gmra.mrb[0].mxu0 %v285
  %v362 = vpop.f32.mrb[0].mxu0
  %v363 = vadd.f32 %v322, %v362
  %v364 = vpop.f32.mrb[0].mxu0
  %v365 = vpop.f32.mrb[0].mxu0
  %v366 = vadd.f32 %v325, %v365
  %v367 = vpop.f32.mrb[0].mxu0
  %368 = vdwg.mxu0
  %s369 = scalar_lea.vmem %s0, 48
  %v370 = vld [vmem:[%s369] sm:$0xff]
  %v371 = vld [vmem:[%s369 + $0x8] sm:$0xf]
  %v372 = vld [vmem:[%s369 + $0xc] sm:$0xff]
  %v373 = vld [vmem:[%s369 + $0x14] sm:$0xf]
  %v378 = vunpack.c.l.b16 %v370
  %v379 = vunpack.c.h.b16 %v370
  %v380 = vunpack.c.l.b16 %v371
  %v381 = vunpack.c.l.b16 %v372
  %v382 = vunpack.c.h.b16 %v372
  %v383 = vunpack.c.l.b16 %v373
  %v384 = vpack.c.b16 %v381, %v378
  %v385 = vpack.c.b16 %v382, %v379
  %v386 = vpack.c.b16 %v383, %v380
  %v390 = vsel %vm178, %v386, 0
  %392 = vmatprep.subr.bf16.mxu0 0
  %393 = vmatpush1.bf16.msra.mxu0 %v142
  %394 = vmatprep.subr.bf16.mxu0 0
  %395 = vmatpush1.bf16.msra.mxu0 %v143
  %396 = vmatprep.subr.bf16.mxu0 0
  %397 = vmatpush1.bf16.msra.mxu0 %v144
  %398 = vmatprep.subr.bf16.mxu0 0
  %399 = vmatpush1.bf16.msra.mxu0 %v145
  %400 = vmatprep.subr.bf16.mxu0 0
  %401 = vmatpush1.bf16.msra.mxu0 %v146
  %402 = vmatprep.subr.bf16.mxu0 0
  %403 = vmatpush1.bf16.msra.mxu0 %v147
  %404 = vmatprep.subr.bf16.mxu0 0
  %405 = vmatpush1.bf16.msra.mxu0 %v148
  %406 = vmatprep.subr.bf16.mxu0 0
  %407 = vmatpush1.bf16.msra.mxu0 %v149
  %408 = vmatprep.subr.bf16.mxu0 0
  %409 = vmatpush1.bf16.msra.mxu0 %v150
  %410 = vmatprep.subr.bf16.mxu0 0
  %411 = vmatpush1.bf16.msra.mxu0 %v151
  %412 = vmatprep.subr.bf16.mxu0 0
  %413 = vmatpush1.bf16.msra.mxu0 %v152
  %414 = vmatprep.subr.bf16.mxu0 0
  %415 = vmatpush1.bf16.msra.mxu0 %v153
  %416 = vmatprep.subr.bf16.mxu0 0
  %417 = vmatpush1.bf16.msra.mxu0 %v154
  %418 = vmatprep.subr.bf16.mxu0 0
  %419 = vmatpush1.bf16.msra.mxu0 %v155
  %420 = vmatprep.subr.bf16.mxu0 0
  %421 = vmatpush1.bf16.msra.mxu0 %v156
  %422 = vmatprep.subr.bf16.mxu0 0
  %423 = vmatpush1.bf16.msra.mxu0 %v157
  %424 = vmatprep.mubr.bf16.mxu0 %v385
  %425 = vmatmul.mubr.bf16.gmra.mrb[0].mxu0 %v384
  %v426 = vpop.f32.mrb[0].mxu0
  %v427 = vadd.f32 0.0, %v426
  %v428 = vpop.f32.mrb[0].mxu0
  %v429 = vpop.f32.mrb[0].mxu0
  %v430 = vadd.f32 0.0, %v429
  %v431 = vpop.f32.mrb[0].mxu0
  %432 = vdwg.mxu0
  %433 = vmatprep.subr.bf16.mxu0 0
  %434 = vmatpush1.bf16.msra.mxu0 %v158
  %435 = vmatprep.subr.bf16.mxu0 0
  %436 = vmatpush1.bf16.msra.mxu0 %v159
  %437 = vmatprep.subr.bf16.mxu0 0
  %438 = vmatpush1.bf16.msra.mxu0 0
  %439 = vmatprep.subr.bf16.mxu0 0
  %440 = vmatpush1.bf16.msra.mxu0 0
  %441 = vmatprep.subr.bf16.mxu0 0
  %442 = vmatpush1.bf16.msra.mxu0 0
  %443 = vmatprep.subr.bf16.mxu0 0
  %444 = vmatpush1.bf16.msra.mxu0 0
  %445 = vmatprep.subr.bf16.mxu0 0
  %446 = vmatpush1.bf16.msra.mxu0 0
  %447 = vmatprep.subr.bf16.mxu0 0
  %448 = vmatpush1.bf16.msra.mxu0 0
  %449 = vmatprep.subr.bf16.mxu0 0
  %450 = vmatpush1.bf16.msra.mxu0 0
  %451 = vmatprep.subr.bf16.mxu0 0
  %452 = vmatpush1.bf16.msra.mxu0 0
  %453 = vmatprep.subr.bf16.mxu0 0
  %454 = vmatpush1.bf16.msra.mxu0 0
  %455 = vmatprep.subr.bf16.mxu0 0
  %456 = vmatpush1.bf16.msra.mxu0 0
  %457 = vmatprep.subr.bf16.mxu0 0
  %458 = vmatpush1.bf16.msra.mxu0 0
  %459 = vmatprep.subr.bf16.mxu0 0
  %460 = vmatpush1.bf16.msra.mxu0 0
  %461 = vmatprep.subr.bf16.mxu0 0
  %462 = vmatpush1.bf16.msra.mxu0 0
  %463 = vmatprep.subr.bf16.mxu0 0
  %464 = vmatpush1.bf16.msra.mxu0 0
  %465 = vmatprep.mubr.bf16.mxu0 0
  %466 = vmatmul.mubr.bf16.gmra.mrb[0].mxu0 %v390
  %v467 = vpop.f32.mrb[0].mxu0
  %v468 = vadd.f32 %v427, %v467
  %v469 = vpop.f32.mrb[0].mxu0
  %v470 = vpop.f32.mrb[0].mxu0
  %v471 = vadd.f32 %v430, %v470
  %v472 = vpop.f32.mrb[0].mxu0
  %473 = vdwg.mxu0
  %s474 = scalar_lea.vmem %s0, 72
  %v475 = vld [vmem:[%s474] sm:$0xff]
  %v476 = vld [vmem:[%s474 + $0x8] sm:$0xf]
  %v477 = vld [vmem:[%s474 + $0xc] sm:$0xff]
  %v478 = vld [vmem:[%s474 + $0x14] sm:$0xf]
  %v483 = vunpack.c.l.b16 %v475
  %v484 = vunpack.c.h.b16 %v475
  %v485 = vunpack.c.l.b16 %v476
  %v486 = vunpack.c.l.b16 %v477
  %v487 = vunpack.c.h.b16 %v477
  %v488 = vunpack.c.l.b16 %v478
  %v489 = vpack.c.b16 %v486, %v483
  %v490 = vpack.c.b16 %v487, %v484
  %v491 = vpack.c.b16 %v488, %v485
  %v495 = vsel %vm178, %v491, 0
  %497 = vmatprep.subr.bf16.mxu0 0
  %498 = vmatpush1.bf16.msra.mxu0 %v142
  %499 = vmatprep.subr.bf16.mxu0 0
  %500 = vmatpush1.bf16.msra.mxu0 %v143
  %501 = vmatprep.subr.bf16.mxu0 0
  %502 = vmatpush1.bf16.msra.mxu0 %v144
  %503 = vmatprep.subr.bf16.mxu0 0
  %504 = vmatpush1.bf16.msra.mxu0 %v145
  %505 = vmatprep.subr.bf16.mxu0 0
  %506 = vmatpush1.bf16.msra.mxu0 %v146
  %507 = vmatprep.subr.bf16.mxu0 0
  %508 = vmatpush1.bf16.msra.mxu0 %v147
  %509 = vmatprep.subr.bf16.mxu0 0
  %510 = vmatpush1.bf16.msra.mxu0 %v148
  %511 = vmatprep.subr.bf16.mxu0 0
  %512 = vmatpush1.bf16.msra.mxu0 %v149
  %513 = vmatprep.subr.bf16.mxu0 0
  %514 = vmatpush1.bf16.msra.mxu0 %v150
  %515 = vmatprep.subr.bf16.mxu0 0
  %516 = vmatpush1.bf16.msra.mxu0 %v151
  %517 = vmatprep.subr.bf16.mxu0 0
  %518 = vmatpush1.bf16.msra.mxu0 %v152
  %519 = vmatprep.subr.bf16.mxu0 0
  %520 = vmatpush1.bf16.msra.mxu0 %v153
  %521 = vmatprep.subr.bf16.mxu0 0
  %522 = vmatpush1.bf16.msra.mxu0 %v154
  %523 = vmatprep.subr.bf16.mxu0 0
  %524 = vmatpush1.bf16.msra.mxu0 %v155
  %525 = vmatprep.subr.bf16.mxu0 0
  %526 = vmatpush1.bf16.msra.mxu0 %v156
  %527 = vmatprep.subr.bf16.mxu0 0
  %528 = vmatpush1.bf16.msra.mxu0 %v157
  %529 = vmatprep.mubr.bf16.mxu0 %v490
  %530 = vmatmul.mubr.bf16.gmra.mrb[0].mxu0 %v489
  %v531 = vpop.f32.mrb[0].mxu0
  %v532 = vadd.f32 0.0, %v531
  %v533 = vpop.f32.mrb[0].mxu0
  %v534 = vpop.f32.mrb[0].mxu0
  %v535 = vadd.f32 0.0, %v534
  %v536 = vpop.f32.mrb[0].mxu0
  %537 = vdwg.mxu0
  %538 = vmatprep.subr.bf16.mxu0 0
  %539 = vmatpush1.bf16.msra.mxu0 %v158
  %540 = vmatprep.subr.bf16.mxu0 0
  %541 = vmatpush1.bf16.msra.mxu0 %v159
  %542 = vmatprep.subr.bf16.mxu0 0
  %543 = vmatpush1.bf16.msra.mxu0 0
  %544 = vmatprep.subr.bf16.mxu0 0
  %545 = vmatpush1.bf16.msra.mxu0 0
  %546 = vmatprep.subr.bf16.mxu0 0
  %547 = vmatpush1.bf16.msra.mxu0 0
  %548 = vmatprep.subr.bf16.mxu0 0
  %549 = vmatpush1.bf16.msra.mxu0 0
  %550 = vmatprep.subr.bf16.mxu0 0
  %551 = vmatpush1.bf16.msra.mxu0 0
  %552 = vmatprep.subr.bf16.mxu0 0
  %553 = vmatpush1.bf16.msra.mxu0 0
  %554 = vmatprep.subr.bf16.mxu0 0
  %555 = vmatpush1.bf16.msra.mxu0 0
  %556 = vmatprep.subr.bf16.mxu0 0
  %557 = vmatpush1.bf16.msra.mxu0 0
  %558 = vmatprep.subr.bf16.mxu0 0
  %559 = vmatpush1.bf16.msra.mxu0 0
  %560 = vmatprep.subr.bf16.mxu0 0
  %561 = vmatpush1.bf16.msra.mxu0 0
  %562 = vmatprep.subr.bf16.mxu0 0
  %563 = vmatpush1.bf16.msra.mxu0 0
  %564 = vmatprep.subr.bf16.mxu0 0
  %565 = vmatpush1.bf16.msra.mxu0 0
  %566 = vmatprep.subr.bf16.mxu0 0
  %567 = vmatpush1.bf16.msra.mxu0 0
  %568 = vmatprep.subr.bf16.mxu0 0
  %569 = vmatpush1.bf16.msra.mxu0 0
  %570 = vmatprep.mubr.bf16.mxu0 0
  %571 = vmatmul.mubr.bf16.gmra.mrb[0].mxu0 %v495
  %v572 = vpop.f32.mrb[0].mxu0
  %v573 = vadd.f32 %v532, %v572
  %v574 = vpop.f32.mrb[0].mxu0
  %v575 = vpop.f32.mrb[0].mxu0
  %v576 = vadd.f32 %v535, %v575
  %v577 = vpop.f32.mrb[0].mxu0
  %578 = vdwg.mxu0
  %v579 = vmax.f32 %v258, %v363
  %v580 = vmax.f32 %v261, %v366
  %v581 = vmax.f32 %v468, %v573
  %v582 = vmax.f32 %v471, %v576
  %v583 = vmax.f32 %v579, %v581
  %v584 = vmax.f32 %v580, %v582
  %v585 = vld [vmem:[%s2] sm:$0x1]
  %v587 = vlaneseq
  %v588 = vshrl.u32 %v587, 7
  %v589 = vsub.s32 0, %v588
  %v590 = vrot.slane %v585, %v589
  %v592 = vadd.f32 %v583, %v590
  %v593 = vadd.f32 %v584, %v590
  %v594 = vmax.f32 %v592, 0.0
  %v595 = vmax.f32 %v593, 0.0
  %v596 = vpack.c.bf16 %v595, %v594
  %v598 = vunpack.c.l.b16 %v596
  %v599 = vunpack.c.h.b16 %v596
  %v600 = vpack.c.b16 %v598, %v598
  %v601 = vpack.c.b16 %v599, %v599
  %604 = vst [vmem:[%s3] sm:$0xf] %v600
  %605 = vst [vmem:[%s3 + $0x4] sm:$0xf] %v601
  // Predicated region
  $region14: #{shapenet_forward.4} parent=0 // pred_check
    _
  $region15: #{shapenet_forward.4} parent=0 // pred_check_branch
    %607 = sbr.rel (0) target = $region17
  $region16: #{shapenet_forward.4} parent=0 // pred_region
    _
  $region17: #{shapenet_forward.4} parent=0 // pred_fallthru
    _
  // Predicated region
  $region18: #{shapenet_forward.4} parent=0 // pred_check
    _
  $region19: #{shapenet_forward.4} parent=0 // pred_check_branch
    %609 = sbr.rel (0) target = $region21
  $region20: #{shapenet_forward.4} parent=0 // pred_region
    _
  $region21: #{shapenet_forward.4} parent=0 // pred_fallthru
    _

// kernel: shapenet_forward.5
$region0: #{shapenet_forward.5}
  #allocation0 [shape = 'u32[]', space=smem, size = 0x4, offset = 0x4, fixed_abs, tag = 'smem constant byte address 0x4 - core index']
  #allocation1 [shape = 'u32[144,128]{1,0:T(1,128)}', space=vmem, size = 0x12000, scoped, tag = 'internal scratch']
  #allocation2 [shape = 'f32[1,128]{1,0:T(1,128)}', space=vmem, size = 0x200, scoped, tag = 'scratch operand']
  %s0 = inlined_call_operand.vmem [shape: bf16[1,256], index: 0, kind: input, shape index: {}]
  %s1 = inlined_call_operand.vmem [shape: bf16[256,128], index: 1, kind: input, shape index: {}]
  %s2 = inlined_call_operand.vmem [shape: f32[1,128], index: 2, kind: input, shape index: {}]
  %s3 = inlined_call_operand.vmem [shape: f32[128,20], index: 3, kind: input, shape index: {}]
  %s4 = inlined_call_operand.vmem [shape: f32[1,20], index: 4, kind: input, shape index: {}]
  %s5 = inlined_call_operand.vmem [shape: f32[20,5], index: 5, kind: input, shape index: {}]
  %s6 = inlined_call_operand.vmem [shape: f32[1,5], index: 6, kind: input, shape index: {}]
  %s7 = inlined_call_operand.hbm [shape: f32[1,5], index: 7, kind: output, shape index: {}]
  %s8 = sld [smem:[#allocation0]]
  $region46: #{shapenet_forward.5} parent=0
    _
  %s10 = ssub.s32 1, %s8
  %s11 = scalar_select 0, %s10, %s8
  $region1: #{shapenet_forward.5} parent=0
    #allocation3 [shape = 'u8[512]{0}', space=vmem, size = 0x400, scoped, tag = 'output window, operand 0, single buffered']
    #allocation4 [shape = 's32[1]{0}', space=sflag, size = 0x4, scoped, tag = 'scoped memory for shapenet_forward.5']
    %12 = vsyncpa [#allocation4], 0
    // Predicated region
    $region2: #{shapenet_forward.5} parent=1 // pred_check
      _
    $region3: #{shapenet_forward.5} parent=1 // pred_check_branch
      %14 = sbr.rel (0) target = $region5
    $region4: #{shapenet_forward.5} parent=1 // pred_region
      _
    $region5: #{shapenet_forward.5} parent=1 // pred_fallthru
      _
    // Predicated region
    $region6: #{shapenet_forward.5} parent=1 // pred_check
      _
    $region7: #{shapenet_forward.5} parent=1 // pred_check_branch
      %16 = sbr.rel (0) target = $region9
    $region8: #{shapenet_forward.5} parent=1 // pred_region
      _
    $region9: #{shapenet_forward.5} parent=1 // pred_fallthru
      _
    // Predicated region
    $region10: #{shapenet_forward.5} parent=1 // pred_check
      _
    $region11: #{shapenet_forward.5} parent=1 // pred_check_branch
      %18 = sbr.rel (0) target = $region13
    $region12: #{shapenet_forward.5} parent=1 // pred_region
      _
    $region13: #{shapenet_forward.5} parent=1 // pred_fallthru
      _
    // Predicated region
    $region14: #{shapenet_forward.5} parent=1 // pred_check
      _
    $region15: #{shapenet_forward.5} parent=1 // pred_check_branch
      %20 = sbr.rel (0) target = $region17
    $region16: #{shapenet_forward.5} parent=1 // pred_region
      _
    $region17: #{shapenet_forward.5} parent=1 // pred_fallthru
      _
    // Predicated region
    $region18: #{shapenet_forward.5} parent=1 // pred_check
      _
    $region19: #{shapenet_forward.5} parent=1 // pred_check_branch
      %22 = sbr.rel (0) target = $region21
    $region20: #{shapenet_forward.5} parent=1 // pred_region
      _
    $region21: #{shapenet_forward.5} parent=1 // pred_fallthru
      _
    // Predicated region
    $region22: #{shapenet_forward.5} parent=1 // pred_check
      _
    $region23: #{shapenet_forward.5} parent=1 // pred_check_branch
      %24 = sbr.rel (0) target = $region25
    $region24: #{shapenet_forward.5} parent=1 // pred_region
      _
    $region25: #{shapenet_forward.5} parent=1 // pred_fallthru
      _
    // Predicated region
    $region26: #{shapenet_forward.5} parent=1 // pred_check
      _
    $region27: #{shapenet_forward.5} parent=1 // pred_check_branch
      %26 = sbr.rel (0) target = $region29
    $region28: #{shapenet_forward.5} parent=1 // pred_region
      _
    $region29: #{shapenet_forward.5} parent=1 // pred_fallthru
      _
    %p28 = scmp.eq.s32.totalorder 0, 0
    // Predicated region
    $region30: #{shapenet_forward.5} parent=1 // pred_check
      %p29 = pneg %p28
    $region31: #{shapenet_forward.5} parent=1 // pred_check_branch
      %31 = sbr.rel (%p29) target = $region33
    $region32: #{shapenet_forward.5} parent=1 // pred_region
      %32 = vst [vmem:[#allocation2] sm:$0x1] 0.0
    $region33: #{shapenet_forward.5} parent=1 // pred_fallthru
      _
    %v33 = vld [vmem:[#allocation2] sm:$0x1]
    %v34 = vld [vmem:[%s0] sm:$0x3]
    %v35 = vld [vmem:[%s1] sm:$0xf]
    %v36 = vld [vmem:[%s1 + $0x4] sm:$0xf]
    %v37 = vld [vmem:[%s1 + $0x8] sm:$0xf]
    %v38 = vld [vmem:[%s1 + $0xc] sm:$0xf]
    %v39 = vld [vmem:[%s1 + $0x10] sm:$0xf]
    %v40 = vld [vmem:[%s1 + $0x14] sm:$0xf]
    %v41 = vld [vmem:[%s1 + $0x18] sm:$0xf]
    %v42 = vld [vmem:[%s1 + $0x1c] sm:$0xf]
    %v43 = vld [vmem:[%s1 + $0x20] sm:$0xf]
    %v44 = vld [vmem:[%s1 + $0x24] sm:$0xf]
    %v45 = vld [vmem:[%s1 + $0x28] sm:$0xf]
    %v46 = vld [vmem:[%s1 + $0x2c] sm:$0xf]
    %v47 = vld [vmem:[%s1 + $0x30] sm:$0xf]
    %v48 = vld [vmem:[%s1 + $0x34] sm:$0xf]
    %v49 = vld [vmem:[%s1 + $0x38] sm:$0xf]
    %v50 = vld [vmem:[%s1 + $0x3c] sm:$0xf]
    %v51 = vld [vmem:[%s1 + $0x40] sm:$0xf]
    %v52 = vld [vmem:[%s1 + $0x44] sm:$0xf]
    %v53 = vld [vmem:[%s1 + $0x48] sm:$0xf]
    %v54 = vld [vmem:[%s1 + $0x4c] sm:$0xf]
    %v55 = vld [vmem:[%s1 + $0x50] sm:$0xf]
    %v56 = vld [vmem:[%s1 + $0x54] sm:$0xf]
    %v57 = vld [vmem:[%s1 + $0x58] sm:$0xf]
    %v58 = vld [vmem:[%s1 + $0x5c] sm:$0xf]
    %v59 = vld [vmem:[%s1 + $0x60] sm:$0xf]
    %v60 = vld [vmem:[%s1 + $0x64] sm:$0xf]
    %v61 = vld [vmem:[%s1 + $0x68] sm:$0xf]
    %v62 = vld [vmem:[%s1 + $0x6c] sm:$0xf]
    %v63 = vld [vmem:[%s1 + $0x70] sm:$0xf]
    %v64 = vld [vmem:[%s1 + $0x74] sm:$0xf]
    %v65 = vld [vmem:[%s1 + $0x78] sm:$0xf]
    %v66 = vld [vmem:[%s1 + $0x7c] sm:$0xf]
    %v69 = vunpack.c.l.s4 1966171168
    %v70 = vunpack.c.0.s8 %v69
    %v71 = vlaneseq
    %v72 = vshrl.u32 %v71, 7
    %v73 = vsub.s32 %v70, %v72
    %v74 = vrot.slane %v34, %v73
    %v75 = vcombine.high %v74, %v74
    %v77 = vunpack.c.l.s4 1966171168
    %v78 = vunpack.c.0.s8 %v77
    %v79 = vlaneseq
    %v80 = vshrl.u32 %v79, 7
    %v81 = vsub.s32 %v78, %v80
    %v82 = vrot.slane %v74, %v81
    %v84 = vunpack.c.l.s4 1966171168
    %v85 = vunpack.c.0.s8 %v84
    %v86 = vlaneseq
    %v87 = vshrl.u32 %v86, 7
    %v88 = vsub.s32 %v85, %v87
    %v89 = vrot.slane %v75, %v88
    %v124 = vunpack.c.l.b16 %v35
    %v125 = vunpack.c.l.b16 %v36
    %v126 = vunpack.c.l.b16 %v37
    %v127 = vunpack.c.l.b16 %v38
    %v128 = vunpack.c.l.b16 %v39
    %v129 = vunpack.c.l.b16 %v40
    %v130 = vunpack.c.l.b16 %v41
    %v131 = vunpack.c.l.b16 %v42
    %v132 = vunpack.c.l.b16 %v43
    %v133 = vunpack.c.l.b16 %v44
    %v134 = vunpack.c.l.b16 %v45
    %v135 = vunpack.c.l.b16 %v46
    %v136 = vunpack.c.l.b16 %v47
    %v137 = vunpack.c.l.b16 %v48
    %v138 = vunpack.c.l.b16 %v49
    %v139 = vunpack.c.l.b16 %v50
    %v140 = vunpack.c.l.b16 %v51
    %v141 = vunpack.c.l.b16 %v52
    %v142 = vunpack.c.l.b16 %v53
    %v143 = vunpack.c.l.b16 %v54
    %v144 = vunpack.c.l.b16 %v55
    %v145 = vunpack.c.l.b16 %v56
    %v146 = vunpack.c.l.b16 %v57
    %v147 = vunpack.c.l.b16 %v58
    %v148 = vunpack.c.l.b16 %v59
    %v149 = vunpack.c.l.b16 %v60
    %v150 = vunpack.c.l.b16 %v61
    %v151 = vunpack.c.l.b16 %v62
    %v152 = vunpack.c.l.b16 %v63
    %v153 = vunpack.c.l.b16 %v64
    %v154 = vunpack.c.l.b16 %v65
    %v155 = vunpack.c.l.b16 %v66
    %v156 = vpack.c.b16 %v125, %v124
    %v157 = vpack.c.b16 %v127, %v126
    %v158 = vpack.c.b16 %v129, %v128
    %v159 = vpack.c.b16 %v131, %v130
    %v160 = vpack.c.b16 %v133, %v132
    %v161 = vpack.c.b16 %v135, %v134
    %v162 = vpack.c.b16 %v137, %v136
    %v163 = vpack.c.b16 %v139, %v138
    %v164 = vpack.c.b16 %v141, %v140
    %v165 = vpack.c.b16 %v143, %v142
    %v166 = vpack.c.b16 %v145, %v144
    %v167 = vpack.c.b16 %v147, %v146
    %v168 = vpack.c.b16 %v149, %v148
    %v169 = vpack.c.b16 %v151, %v150
    %v170 = vpack.c.b16 %v153, %v152
    %v171 = vpack.c.b16 %v155, %v154
    %188 = vmatprep.subr.bf16.mxu0 0
    %189 = vmatpush1.bf16.msra.mxu0 %v156
    %190 = vmatprep.subr.bf16.mxu0 0
    %191 = vmatpush1.bf16.msra.mxu0 %v157
    %192 = vmatprep.subr.bf16.mxu0 0
    %193 = vmatpush1.bf16.msra.mxu0 %v158
    %194 = vmatprep.subr.bf16.mxu0 0
    %195 = vmatpush1.bf16.msra.mxu0 %v159
    %196 = vmatprep.subr.bf16.mxu0 0
    %197 = vmatpush1.bf16.msra.mxu0 %v160
    %198 = vmatprep.subr.bf16.mxu0 0
    %199 = vmatpush1.bf16.msra.mxu0 %v161
    %200 = vmatprep.subr.bf16.mxu0 0
    %201 = vmatpush1.bf16.msra.mxu0 %v162
    %202 = vmatprep.subr.bf16.mxu0 0
    %203 = vmatpush1.bf16.msra.mxu0 %v163
    %204 = vmatprep.subr.bf16.mxu0 0
    %205 = vmatpush1.bf16.msra.mxu0 %v164
    %206 = vmatprep.subr.bf16.mxu0 0
    %207 = vmatpush1.bf16.msra.mxu0 %v165
    %208 = vmatprep.subr.bf16.mxu0 0
    %209 = vmatpush1.bf16.msra.mxu0 %v166
    %210 = vmatprep.subr.bf16.mxu0 0
    %211 = vmatpush1.bf16.msra.mxu0 %v167
    %212 = vmatprep.subr.bf16.mxu0 0
    %213 = vmatpush1.bf16.msra.mxu0 %v168
    %214 = vmatprep.subr.bf16.mxu0 0
    %215 = vmatpush1.bf16.msra.mxu0 %v169
    %216 = vmatprep.subr.bf16.mxu0 0
    %217 = vmatpush1.bf16.msra.mxu0 %v170
    %218 = vmatprep.subr.bf16.mxu0 0
    %219 = vmatpush1.bf16.msra.mxu0 %v171
    %220 = vmatprep.mubr.bf16.mxu0 %v89
    %221 = vmatmul.mubr.bf16.gmra.mrb[0].mxu0 %v82
    %v222 = vpop.f32.mrb[0].mxu0
    %v223 = vadd.f32 0.0, %v222
    %v224 = vpop.f32.mrb[0].mxu0
    %v225 = vpop.f32.mrb[0].mxu0
    %v226 = vpop.f32.mrb[0].mxu0
    %227 = vdwg.mxu0
    %v228 = vadd.f32 %v33, %v223
    %229 = vst [vmem:[#allocation2] sm:$0x1] %v228
    // Predicated region
    $region34: #{shapenet_forward.5} parent=1 // pred_check
      %p230 = pneg %p28
    $region35: #{shapenet_forward.5} parent=1 // pred_check_branch
      %232 = sbr.rel (%p230) target = $region37
    $region36: #{shapenet_forward.5} parent=1 // pred_region
      %v233 = vld [vmem:[#allocation2] sm:$0x1]
      %v234 = vld [vmem:[%s2] sm:$0x1]
      %v235 = vadd.f32 %v233, %v234
      %v236 = vmax.f32 %v235, 0.0
      %v237 = vld [vmem:[%s3] sm:$0xff]
      %v238 = vld [vmem:[%s3 + $0x8] sm:$0xff]
      %v239 = vld [vmem:[%s3 + $0x10] sm:$0xff]
      %v240 = vld [vmem:[%s3 + $0x18] sm:$0xff]
      %v241 = vld [vmem:[%s3 + $0x20] sm:$0xff]
      %v242 = vld [vmem:[%s3 + $0x28] sm:$0xff]
      %v243 = vld [vmem:[%s3 + $0x30] sm:$0xff]
      %v244 = vld [vmem:[%s3 + $0x38] sm:$0xff]
      %v245 = vld [vmem:[%s3 + $0x40] sm:$0xff]
      %v246 = vld [vmem:[%s3 + $0x48] sm:$0xff]
      %v247 = vld [vmem:[%s3 + $0x50] sm:$0xff]
      %v248 = vld [vmem:[%s3 + $0x58] sm:$0xff]
      %v249 = vld [vmem:[%s3 + $0x60] sm:$0xff]
      %v250 = vld [vmem:[%s3 + $0x68] sm:$0xff]
      %v251 = vld [vmem:[%s3 + $0x70] sm:$0xff]
      %v252 = vld [vmem:[%s3 + $0x78] sm:$0xff]
      %v253 = vld [vmem:[%s4] sm:$0x1]
      %254 = vmatprep.subr.mxu0 0.0
      %255 = vmatpush1.msra.mxu0 %v237
      %256 = vmatprep.subr.mxu0 0.0
      %257 = vmatpush1.msra.mxu0 %v238
      %258 = vmatprep.subr.mxu0 0.0
      %259 = vmatpush1.msra.mxu0 %v239
      %260 = vmatprep.subr.mxu0 0.0
      %261 = vmatpush1.msra.mxu0 %v240
      %262 = vmatprep.subr.mxu0 0.0
      %263 = vmatpush1.msra.mxu0 %v241
      %264 = vmatprep.subr.mxu0 0.0
      %265 = vmatpush1.msra.mxu0 %v242
      %266 = vmatprep.subr.mxu0 0.0
      %267 = vmatpush1.msra.mxu0 %v243
      %268 = vmatprep.subr.mxu0 0.0
      %269 = vmatpush1.msra.mxu0 %v244
      %270 = vmatprep.subr.mxu0 0.0
      %271 = vmatpush1.msra.mxu0 %v245
      %272 = vmatprep.subr.mxu0 0.0
      %273 = vmatpush1.msra.mxu0 %v246
      %274 = vmatprep.subr.mxu0 0.0
      %275 = vmatpush1.msra.mxu0 %v247
      %276 = vmatprep.subr.mxu0 0.0
      %277 = vmatpush1.msra.mxu0 %v248
      %278 = vmatprep.subr.mxu0 0.0
      %279 = vmatpush1.msra.mxu0 %v249
      %280 = vmatprep.subr.mxu0 0.0
      %281 = vmatpush1.msra.mxu0 %v250
      %282 = vmatprep.subr.mxu0 0.0
      %283 = vmatpush1.msra.mxu0 %v251
      %284 = vmatprep.subr.mxu0 0.0
      %285 = vmatpush1.msra.mxu0 %v252
      %286 = vmatprep.subr.mxu0 0.0
      %287 = vmatpush1.msra.mxu0 0.0
      %288 = vmatprep.subr.mxu0 0.0
      %289 = vmatpush1.msra.mxu0 0.0
      %290 = vmatprep.subr.mxu0 0.0
      %291 = vmatpush1.msra.mxu0 0.0
      %292 = vmatprep.subr.mxu0 0.0
      %293 = vmatpush1.msra.mxu0 0.0
      %294 = vmatprep.subr.mxu0 0.0
      %295 = vmatpush1.msra.mxu0 0.0
      %296 = vmatprep.subr.mxu0 0.0
      %297 = vmatpush1.msra.mxu0 0.0
      %298 = vmatprep.subr.mxu0 0.0
      %299 = vmatpush1.msra.mxu0 0.0
      %300 = vmatprep.subr.mxu0 0.0
      %301 = vmatpush1.msra.mxu0 0.0
      %302 = vmatprep.subr.mxu0 0.0
      %303 = vmatpush1.msra.mxu0 0.0
      %304 = vmatprep.subr.mxu0 0.0
      %305 = vmatpush1.msra.mxu0 0.0
      %306 = vmatprep.subr.mxu0 0.0
      %307 = vmatpush1.msra.mxu0 0.0
      %308 = vmatprep.subr.mxu0 0.0
      %309 = vmatpush1.msra.mxu0 0.0
      %310 = vmatprep.subr.mxu0 0.0
      %311 = vmatpush1.msra.mxu0 0.0
      %312 = vmatprep.subr.mxu0 0.0
      %313 = vmatpush1.msra.mxu0 0.0
      %314 = vmatprep.subr.mxu0 0.0
      %315 = vmatpush1.msra.mxu0 0.0
      %316 = vmatprep.subr.mxu0 0.0
      %317 = vmatpush1.msra.mxu0 0.0
      %318 = vmatprep.mubr.f32.mxu0 0.0
      %319 = vmatmul.mubr.f32.gmra.mrb[0].mxu0 %v236
      %v320 = vpop.f32.mrb[0].mxu0
      %v321 = vadd.f32 %v253, %v320
      %v322 = vpop.f32.mrb[0].mxu0
      %323 = vdwg.mxu0
      %v324 = vmax.f32 %v321, 0.0
      %v325 = vld [vmem:[%s5] sm:$0xff]
      %v326 = vld [vmem:[%s5 + $0x8] sm:$0xff]
      %v327 = vld [vmem:[%s5 + $0x10] sm:$0xf]
      %v328 = vld [vmem:[%s6] sm:$0x1]
      %vm329 = vcmask 162816
      %v331 = vsel %vm329, %v324, 0
      %vm333 = vcmask 1043456
      %v335 = vsel %vm333, %v327, 0
      %337 = vmatprep.subr.mxu0 0.0
      %338 = vmatpush1.msra.mxu0 %v325
      %339 = vmatprep.subr.mxu0 0.0
      %340 = vmatpush1.msra.mxu0 %v326
      %341 = vmatprep.subr.mxu0 0.0
      %342 = vmatpush1.msra.mxu0 %v335
      %343 = vmatprep.subr.mxu0 0.0
      %344 = vmatpush1.msra.mxu0 0.0
      %345 = vmatprep.subr.mxu0 0.0
      %346 = vmatpush1.msra.mxu0 0.0
      %347 = vmatprep.subr.mxu0 0.0
      %348 = vmatpush1.msra.mxu0 0.0
      %349 = vmatprep.subr.mxu0 0.0
      %350 = vmatpush1.msra.mxu0 0.0
      %351 = vmatprep.subr.mxu0 0.0
      %352 = vmatpush1.msra.mxu0 0.0
      %353 = vmatprep.subr.mxu0 0.0
      %354 = vmatpush1.msra.mxu0 0.0
      %355 = vmatprep.subr.mxu0 0.0
      %356 = vmatpush1.msra.mxu0 0.0
      %357 = vmatprep.subr.mxu0 0.0
      %358 = vmatpush1.msra.mxu0 0.0
      %359 = vmatprep.subr.mxu0 0.0
      %360 = vmatpush1.msra.mxu0 0.0
      %361 = vmatprep.subr.mxu0 0.0
      %362 = vmatpush1.msra.mxu0 0.0
      %363 = vmatprep.subr.mxu0 0.0
      %364 = vmatpush1.msra.mxu0 0.0
      %365 = vmatprep.subr.mxu0 0.0
      %366 = vmatpush1.msra.mxu0 0.0
      %367 = vmatprep.subr.mxu0 0.0
      %368 = vmatpush1.msra.mxu0 0.0
      %369 = vmatprep.subr.mxu0 0.0
      %370 = vmatpush1.msra.mxu0 0.0
      %371 = vmatprep.subr.mxu0 0.0
      %372 = vmatpush1.msra.mxu0 0.0
      %373 = vmatprep.subr.mxu0 0.0
      %374 = vmatpush1.msra.mxu0 0.0
      %375 = vmatprep.subr.mxu0 0.0
      %376 = vmatpush1.msra.mxu0 0.0
      %377 = vmatprep.subr.mxu0 0.0
      %378 = vmatpush1.msra.mxu0 0.0
      %379 = vmatprep.subr.mxu0 0.0
      %380 = vmatpush1.msra.mxu0 0.0
      %381 = vmatprep.subr.mxu0 0.0
      %382 = vmatpush1.msra.mxu0 0.0
      %383 = vmatprep.subr.mxu0 0.0
      %384 = vmatpush1.msra.mxu0 0.0
      %385 = vmatprep.subr.mxu0 0.0
      %386 = vmatpush1.msra.mxu0 0.0
      %387 = vmatprep.subr.mxu0 0.0
      %388 = vmatpush1.msra.mxu0 0.0
      %389 = vmatprep.subr.mxu0 0.0
      %390 = vmatpush1.msra.mxu0 0.0
      %391 = vmatprep.subr.mxu0 0.0
      %392 = vmatpush1.msra.mxu0 0.0
      %393 = vmatprep.subr.mxu0 0.0
      %394 = vmatpush1.msra.mxu0 0.0
      %395 = vmatprep.subr.mxu0 0.0
      %396 = vmatpush1.msra.mxu0 0.0
      %397 = vmatprep.subr.mxu0 0.0
      %398 = vmatpush1.msra.mxu0 0.0
      %399 = vmatprep.subr.mxu0 0.0
      %400 = vmatpush1.msra.mxu0 0.0
      %401 = vmatprep.mubr.f32.mxu0 0.0
      %402 = vmatmul.mubr.f32.gmra.mrb[0].mxu0 %v331
      %v403 = vpop.f32.mrb[0].mxu0
      %v404 = vadd.f32 %v328, %v403
      %v405 = vpop.f32.mrb[0].mxu0
      %406 = vdwg.mxu0
      %v407 = vxor.u32 %v404, 2147483648
      %v408 = vmul.f32 %v407, 1.442695
      %v409 = vpow.pop %v408
      %v410 = vadd.f32 %v409, 1.0
      %v411 = vrcp.pop %v410
      %v412 = vmul.f32 1.0, %v411
      %v413 = vmul.f32 %v412, 4.0
      %vm414 = vcmask 32768
      %415 = vst.msk [vmem:[#allocation3] sm:$0x1] %vm414, %v413
    $region37: #{shapenet_forward.5} parent=1 // pred_fallthru
      _
    // Predicated region
    $region38: #{shapenet_forward.5} parent=1 // pred_check
      _
    $region39: #{shapenet_forward.5} parent=1 // pred_check_branch
      %417 = sbr.rel (0) target = $region41
    $region40: #{shapenet_forward.5} parent=1 // pred_region
      %s419 = ssub.s32 16, 16
      %420 = vsyncadd [#allocation4], %s419
      %s422 = sshll.u32 [#allocation3], 4
      %s423 = int_to_ptr.vmem [resolvable:$true] %s422
      %425 = dma.vmem_to_hbm [thread:$0]  %s423, 16, %s7, [#allocation4]
    $region41: #{shapenet_forward.5} parent=1 // pred_fallthru
      _
    // Predicated region
    $region42: #{shapenet_forward.5} parent=1 // pred_check
      _
    $region43: #{shapenet_forward.5} parent=1 // pred_check_branch
      %427 = sbr.rel (0) target = $region45
    $region44: #{shapenet_forward.5} parent=1 // pred_region
      %428 = dma.done [#allocation4], 16
    $region45: #{shapenet_forward.5} parent=1 // pred_fallthru
      _
    %429 = vsyncpa [#allocation4], 1

</llo_original>
